<compile_context>
chip_gen: v5e
topology: v5e:2x2
jax: 0.10.0
libtpu: 0.0.40
codegen_flags: <defaults>
</compile_context>

<pallas_src>
import numpy as np
import jax
import jax.numpy as jnp
from jax import lax
from jax.experimental import pallas as pl
from jax.experimental.pallas import tpu as pltpu


_LANES = 128   # lane width of every block (full vreg lane dim)
_TILE = 16     # rows per inner iteration = two (8,128) vreg tiles in flight


# ----------------------------- Pallas kernel ---------------------------------

def _make_kaf2d_kernel(grid1d, gamma, block_rows):
    """grid1d: tuple of D python floats (1-D dictionary), baked as constants."""
    D = len(grid1d)
    D2 = D * D
    sqrt_g = float(np.sqrt(float(gamma)))
    gs = tuple(float(g) * sqrt_g for g in grid1d)     # pre-scaled dictionary points
    n_full = block_rows // _TILE
    rem = block_rows - n_full * _TILE

    def kernel(alpha_ref, x1_ref, x2_ref, o_ref):
        # alpha_ref : (1, D*D) float32 in SMEM (this channel's coefficients)
        # x1_ref/x2_ref : (block_rows, 128) float32 in VMEM
        # o_ref         : (block_rows, 128) float32 in VMEM

        # Hoist loop-invariant alpha scalars: one SMEM read each per grid step
        # instead of one per chunk iteration (frees the scalar-issue slot).
        a = [alpha_ref[0, d] for d in range(D2)]

        def compute(r0, nrows):
            # pre-scale by sqrt(gamma): gamma*(x-g)^2 == (x*sg - g*sg)^2
            u1 = x1_ref[pl.ds(r0, nrows), :] * sqrt_g       # (nrows, 128)
            u2 = x2_ref[pl.ds(r0, nrows), :] * sqrt_g       # (nrows, 128)

            # Kx_j = exp(-gamma*(x1 - grid[j])^2), j = fast meshgrid axis.
            kx = []
            for j in range(D):
                t = u1 - gs[j]
                kx.append(jnp.exp(-(t * t)))

            # acc = sum_i Ky_i * (sum_j alpha[i*D+j] * Kx_j); both chains split
            # into two partial accumulators to shorten serial FMA chains.
            acc = [None, None]
            for i in range(D):
                t = u2 - gs[i]
                ky = jnp.exp(-(t * t))                       # Ky_i
                w = [None, None]
                for j in range(D):
                    term = kx[j] * a[i * D + j]
                    s = j & 1
                    w[s] = term if w[s] is None else w[s] + term
                wi = w[0] if w[1] is None else w[0] + w[1]
                term = ky * wi
                s = i & 1
                acc[s] = term if acc[s] is None else acc[s] + term
            out = acc[0] if acc[1] is None else acc[0] + acc[1]

            o_ref[pl.ds(r0, nrows), :] = out.astype(o_ref.dtype)

        if n_full > 0:
            def body(c, carry):
                compute(pl.multiple_of(c * _TILE, _TILE), _TILE)
                return carry
            lax.fori_loop(0, n_full, body, 0)
        if rem > 0:
            compute(n_full * _TILE, rem)      # static tail (partial vreg tile)

    return kernel


# ------------------------------- wrapper --------------------------------------

def _select_block_rows(rows, parallel_steps, max_block_rows):
    """Pick rows-per-block.  Preferences, in order:
      * total grid >= ~8 steps so v7x's two TensorCores stay busy,
      * blocks >= 64 rows when possible (amortize ~0.35us per-grid-step cost),
      * an exact divisor of `rows` so no row padding (no extra HBM copy).
    Returns (tm, rows_pad)."""
    if rows <= 0:
        return 1, 1
    target_nb = max(1, -(-8 // max(parallel_steps, 1)))
    cap = min(max_block_rows, max(64, -(-rows // target_nb)))
    cap = min(cap, rows)
    best = 1
    d = 1
    while d * d <= rows:
        if rows % d == 0:
            for t in (d, rows // d):
                if t <= cap:
                    best = max(best, t)
        d += 1
    if best * 4 >= cap or best == rows:
        return best, rows                      # exact divisor, no padding
    tm = cap
    return tm, -(-rows // tm) * tm             # pad rows up to a multiple of tm


def kaf2d_forward(x, alpha, grid1d, gamma, *, max_block_rows=1024):
    """x: (B, 2P, H, W) float32 NCHW. alpha: (1, P, D*D). Returns (B, P, H, W)."""
    B, C, H, W = x.shape
    assert C % 2 == 0, "channel count must be even"
    P = C // 2
    grid1d = tuple(float(v) for v in np.asarray(grid1d, dtype=np.float64).reshape(-1))
    D = len(grid1d)
    D2 = D * D
    HW = H * W

    rows = -(-HW // _LANES)
    tm, rows_pad = _select_block_rows(rows, B * P, int(max_block_rows))
    n_pad = rows_pad * _LANES

    # Keep the original NCHW layout; only free reshapes when H*W % 128 == 0
    # and rows_pad == rows.  Otherwise a single pad (no transpose) is needed.
    xf = jnp.asarray(x, jnp.float32).reshape(B, C, HW)
    if n_pad != HW:
        xf = jnp.pad(xf, ((0, 0), (0, 0), (0, n_pad - HW)))
    xr = xf.reshape(B, C, rows_pad, _LANES)

    # Per-channel alpha blocks live in SMEM: shape (P, 1, D*D), block (1, D*D).
    alpha3 = jnp.asarray(alpha, jnp.float32).reshape(P, 1, D2)

    kernel = _make_kaf2d_kernel(grid1d, float(gamma), tm)
    nb = rows_pad // tm

    # Actual VMEM footprint: 3 arrays x 2 buffers x tm*128*4 B; generous margin.
    block_bytes = tm * _LANES * 4
    vmem_limit = int(min(32 << 20, max(8 << 20, 8 * 3 * block_bytes)))

    out = pl.pallas_call(
        kernel,
        out_shape=jax.ShapeDtypeStruct((B, P, rows_pad, _LANES), jnp.float32),
        grid_spec=pltpu.PrefetchScalarGridSpec(
            num_scalar_prefetch=0,
            grid=(B, P, nb),
            in_specs=[
                # alpha: one channel's (1, D*D) coefficient block in SMEM
                pl.BlockSpec((None, 1, D2), lambda b, p, n: (p, 0, 0),
                             memory_space=pltpu.MemorySpace.SMEM),
                # x1: channel p of the original NCHW tensor
                pl.BlockSpec((None, None, tm, _LANES),
                             lambda b, p, n: (b, p, n, 0)),
                # x2: channel p + P of the same tensor
                pl.BlockSpec((None, None, tm, _LANES),
                             lambda b, p, n, P=P: (b, p + P, n, 0)),
            ],
            out_specs=pl.BlockSpec((None, None, tm, _LANES),
                                   lambda b, p, n: (b, p, n, 0)),
        ),
        compiler_params=pltpu.CompilerParams(
            dimension_semantics=("parallel", "parallel", "parallel"),
            vmem_limit_bytes=vmem_limit,
        ),
    )(alpha3, xr, xr)

    out = out.reshape(B, P, n_pad)[:, :, :HW].reshape(B, P, H, W)
    return out


# ----------------------- pure-JAX reference (for checking) --------------------

def kaf2d_reference(x, alpha, dx_flat, dy_flat, gamma):
    B, C, H, W = x.shape
    P = C // 2
    x1 = x[:, :P][..., None]                               # (B,P,H,W,1)
    x2 = x[:, P:][..., None]
    dx = dx_flat.reshape(1, 1, 1, 1, -1)
    dy = dy_flat.reshape(1, 1, 1, 1, -1)
    k = jnp.exp(-gamma * (x1 - dx) ** 2 - gamma * (x2 - dy) ** 2)
    return jnp.sum(k * alpha.reshape(1, P, 1, 1, -1), axis=4)


# ----------------------------------- main --------------------------------------

if __name__ == "__main__":
    def make_dictionary(D, boundary):
        # Identical to the PyTorch buffers Dx / Dy and gamma in KAF2D.__init__.
        g = np.linspace(-boundary, boundary, D).astype(np.float32).reshape(-1, 1)
        Dx_np, Dy_np = np.meshgrid(g, g)
        interval = float(g[1, 0] - g[0, 0])
        sigma = 2.0 * interval / np.sqrt(2.0)
        gamma = 0.5 / (sigma ** 2)
        return (g.reshape(-1),
                jnp.asarray(Dx_np.reshape(-1), jnp.float32),
                jnp.asarray(Dy_np.reshape(-1), jnp.float32),
                float(gamma))

    key = jax.random.PRNGKey(0)

    # Case 1: H*W divisible by 128 (transpose-free, copy-free path), P=2, D=10.
    D1, P1 = 10, 2
    g1, dx1, dy1, gamma1 = make_dictionary(D1, 3.0)
    key, ka, kx = jax.random.split(key, 3)
    alpha1 = 0.3 * jax.random.normal(ka, (1, P1, D1 * D1), dtype=jnp.float32)
    x1 = jax.random.normal(kx, (2, 2 * P1, 16, 16), dtype=jnp.float32)
    y1 = jax.block_until_ready(kaf2d_forward(x1, alpha1, g1, gamma1))
    y1_ref = kaf2d_reference(x1, alpha1, dx1, dy1, gamma1)
    np.testing.assert_allclose(np.asarray(y1), np.asarray(y1_ref),
                               rtol=1e-4, atol=1e-4)
    assert y1.shape == (2, P1, 16, 16)

    # Case 2: H*W NOT divisible by 128 (padding path) and P=3, D=7.
    D2_, P2 = 7, 3
    g2, dx2, dy2, gamma2 = make_dictionary(D2_, 2.0)
    key, ka, kx = jax.random.split(key, 3)
    alpha2 = 0.3 * jax.random.normal(ka, (1, P2, D2_ * D2_), dtype=jnp.float32)
    x2 = jax.random.normal(kx, (1, 2 * P2, 7, 9), dtype=jnp.float32)
    y2 = jax.block_until_ready(kaf2d_forward(x2, alpha2, g2, gamma2))
    y2_ref = kaf2d_reference(x2, alpha2, dx2, dy2, gamma2)
    np.testing.assert_allclose(np.asarray(y2), np.asarray(y2_ref),
                               rtol=1e-4, atol=1e-4)
    assert y2.shape == (1, P2, 7, 9)

    print("KERNEL_OK")
</pallas_src>

<mosaic_0001>
module attributes {stable_mosaic.version = 11 : i64} {
  func.func @kernel(%arg0: i32, %arg1: i32, %arg2: i32, %arg3: memref<1x1x100xf32, #tpu.memory_space<smem>>, %arg4: memref<1x1x2x128xf32, #tpu.memory_space<vmem>>, %arg5: memref<1x1x2x128xf32, #tpu.memory_space<vmem>>, %arg6: memref<1x1x2x128xf32, #tpu.memory_space<vmem>>) attributes {dimension_semantics = [#tpu.dimension_semantics<parallel>, #tpu.dimension_semantics<parallel>, #tpu.dimension_semantics<parallel>], iteration_bounds = array<i64: 2, 2, 1>, scalar_prefetch = 0 : i64, scratch_operands = 0 : i64, tpu.core_type = #tpu.core_type<tc>, window_params = [{transform_indices = @transform_0, window_bounds = array<i64: 1, 1, 100>}, {transform_indices = @transform_1, window_bounds = array<i64: 1, 1, 2, 128>}, {transform_indices = @transform_2, window_bounds = array<i64: 1, 1, 2, 128>}, {transform_indices = @transform_3, window_bounds = array<i64: 1, 1, 2, 128>}]} {
    %c0 = arith.constant 0 : index
    %c0_0 = arith.constant 0 : index
    %c0_1 = arith.constant 0 : index
    %0 = memref.load %arg3[%c0, %c0_0, %c0_1] : memref<1x1x100xf32, #tpu.memory_space<smem>>
    %c0_2 = arith.constant 0 : index
    %c0_3 = arith.constant 0 : index
    %c1 = arith.constant 1 : index
    %1 = memref.load %arg3[%c0_2, %c0_3, %c1] : memref<1x1x100xf32, #tpu.memory_space<smem>>
    %c0_4 = arith.constant 0 : index
    %c0_5 = arith.constant 0 : index
    %c2 = arith.constant 2 : index
    %2 = memref.load %arg3[%c0_4, %c0_5, %c2] : memref<1x1x100xf32, #tpu.memory_space<smem>>
    %c0_6 = arith.constant 0 : index
    %c0_7 = arith.constant 0 : index
    %c3 = arith.constant 3 : index
    %3 = memref.load %arg3[%c0_6, %c0_7, %c3] : memref<1x1x100xf32, #tpu.memory_space<smem>>
    %c0_8 = arith.constant 0 : index
    %c0_9 = arith.constant 0 : index
    %c4 = arith.constant 4 : index
    %4 = memref.load %arg3[%c0_8, %c0_9, %c4] : memref<1x1x100xf32, #tpu.memory_space<smem>>
    %c0_10 = arith.constant 0 : index
    %c0_11 = arith.constant 0 : index
    %c5 = arith.constant 5 : index
    %5 = memref.load %arg3[%c0_10, %c0_11, %c5] : memref<1x1x100xf32, #tpu.memory_space<smem>>
    %c0_12 = arith.constant 0 : index
    %c0_13 = arith.constant 0 : index
    %c6 = arith.constant 6 : index
    %6 = memref.load %arg3[%c0_12, %c0_13, %c6] : memref<1x1x100xf32, #tpu.memory_space<smem>>
    %c0_14 = arith.constant 0 : index
    %c0_15 = arith.constant 0 : index
    %c7 = arith.constant 7 : index
    %7 = memref.load %arg3[%c0_14, %c0_15, %c7] : memref<1x1x100xf32, #tpu.memory_space<smem>>
    %c0_16 = arith.constant 0 : index
    %c0_17 = arith.constant 0 : index
    %c8 = arith.constant 8 : index
    %8 = memref.load %arg3[%c0_16, %c0_17, %c8] : memref<1x1x100xf32, #tpu.memory_space<smem>>
    %c0_18 = arith.constant 0 : index
    %c0_19 = arith.constant 0 : index
    %c9 = arith.constant 9 : index
    %9 = memref.load %arg3[%c0_18, %c0_19, %c9] : memref<1x1x100xf32, #tpu.memory_space<smem>>
    %c0_20 = arith.constant 0 : index
    %c0_21 = arith.constant 0 : index
    %c10 = arith.constant 10 : index
    %10 = memref.load %arg3[%c0_20, %c0_21, %c10] : memref<1x1x100xf32, #tpu.memory_space<smem>>
    %c0_22 = arith.constant 0 : index
    %c0_23 = arith.constant 0 : index
    %c11 = arith.constant 11 : index
    %11 = memref.load %arg3[%c0_22, %c0_23, %c11] : memref<1x1x100xf32, #tpu.memory_space<smem>>
    %c0_24 = arith.constant 0 : index
    %c0_25 = arith.constant 0 : index
    %c12 = arith.constant 12 : index
    %12 = memref.load %arg3[%c0_24, %c0_25, %c12] : memref<1x1x100xf32, #tpu.memory_space<smem>>
    %c0_26 = arith.constant 0 : index
    %c0_27 = arith.constant 0 : index
    %c13 = arith.constant 13 : index
    %13 = memref.load %arg3[%c0_26, %c0_27, %c13] : memref<1x1x100xf32, #tpu.memory_space<smem>>
    %c0_28 = arith.constant 0 : index
    %c0_29 = arith.constant 0 : index
    %c14 = arith.constant 14 : index
    %14 = memref.load %arg3[%c0_28, %c0_29, %c14] : memref<1x1x100xf32, #tpu.memory_space<smem>>
    %c0_30 = arith.constant 0 : index
    %c0_31 = arith.constant 0 : index
    %c15 = arith.constant 15 : index
    %15 = memref.load %arg3[%c0_30, %c0_31, %c15] : memref<1x1x100xf32, #tpu.memory_space<smem>>
    %c0_32 = arith.constant 0 : index
    %c0_33 = arith.constant 0 : index
    %c16 = arith.constant 16 : index
    %16 = memref.load %arg3[%c0_32, %c0_33, %c16] : memref<1x1x100xf32, #tpu.memory_space<smem>>
    %c0_34 = arith.constant 0 : index
    %c0_35 = arith.constant 0 : index
    %c17 = arith.constant 17 : index
    %17 = memref.load %arg3[%c0_34, %c0_35, %c17] : memref<1x1x100xf32, #tpu.memory_space<smem>>
    %c0_36 = arith.constant 0 : index
    %c0_37 = arith.constant 0 : index
    %c18 = arith.constant 18 : index
    %18 = memref.load %arg3[%c0_36, %c0_37, %c18] : memref<1x1x100xf32, #tpu.memory_space<smem>>
    %c0_38 = arith.constant 0 : index
    %c0_39 = arith.constant 0 : index
    %c19 = arith.constant 19 : index
    %19 = memref.load %arg3[%c0_38, %c0_39, %c19] : memref<1x1x100xf32, #tpu.memory_space<smem>>
    %c0_40 = arith.constant 0 : index
    %c0_41 = arith.constant 0 : index
    %c20 = arith.constant 20 : index
    %20 = memref.load %arg3[%c0_40, %c0_41, %c20] : memref<1x1x100xf32, #tpu.memory_space<smem>>
    %c0_42 = arith.constant 0 : index
    %c0_43 = arith.constant 0 : index
    %c21 = arith.constant 21 : index
    %21 = memref.load %arg3[%c0_42, %c0_43, %c21] : memref<1x1x100xf32, #tpu.memory_space<smem>>
    %c0_44 = arith.constant 0 : index
    %c0_45 = arith.constant 0 : index
    %c22 = arith.constant 22 : index
    %22 = memref.load %arg3[%c0_44, %c0_45, %c22] : memref<1x1x100xf32, #tpu.memory_space<smem>>
    %c0_46 = arith.constant 0 : index
    %c0_47 = arith.constant 0 : index
    %c23 = arith.constant 23 : index
    %23 = memref.load %arg3[%c0_46, %c0_47, %c23] : memref<1x1x100xf32, #tpu.memory_space<smem>>
    %c0_48 = arith.constant 0 : index
    %c0_49 = arith.constant 0 : index
    %c24 = arith.constant 24 : index
    %24 = memref.load %arg3[%c0_48, %c0_49, %c24] : memref<1x1x100xf32, #tpu.memory_space<smem>>
    %c0_50 = arith.constant 0 : index
    %c0_51 = arith.constant 0 : index
    %c25 = arith.constant 25 : index
    %25 = memref.load %arg3[%c0_50, %c0_51, %c25] : memref<1x1x100xf32, #tpu.memory_space<smem>>
    %c0_52 = arith.constant 0 : index
    %c0_53 = arith.constant 0 : index
    %c26 = arith.constant 26 : index
    %26 = memref.load %arg3[%c0_52, %c0_53, %c26] : memref<1x1x100xf32, #tpu.memory_space<smem>>
    %c0_54 = arith.constant 0 : index
    %c0_55 = arith.constant 0 : index
    %c27 = arith.constant 27 : index
    %27 = memref.load %arg3[%c0_54, %c0_55, %c27] : memref<1x1x100xf32, #tpu.memory_space<smem>>
    %c0_56 = arith.constant 0 : index
    %c0_57 = arith.constant 0 : index
    %c28 = arith.constant 28 : index
    %28 = memref.load %arg3[%c0_56, %c0_57, %c28] : memref<1x1x100xf32, #tpu.memory_space<smem>>
    %c0_58 = arith.constant 0 : index
    %c0_59 = arith.constant 0 : index
    %c29 = arith.constant 29 : index
    %29 = memref.load %arg3[%c0_58, %c0_59, %c29] : memref<1x1x100xf32, #tpu.memory_space<smem>>
    %c0_60 = arith.constant 0 : index
    %c0_61 = arith.constant 0 : index
    %c30 = arith.constant 30 : index
    %30 = memref.load %arg3[%c0_60, %c0_61, %c30] : memref<1x1x100xf32, #tpu.memory_space<smem>>
    %c0_62 = arith.constant 0 : index
    %c0_63 = arith.constant 0 : index
    %c31 = arith.constant 31 : index
    %31 = memref.load %arg3[%c0_62, %c0_63, %c31] : memref<1x1x100xf32, #tpu.memory_space<smem>>
    %c0_64 = arith.constant 0 : index
    %c0_65 = arith.constant 0 : index
    %c32 = arith.constant 32 : index
    %32 = memref.load %arg3[%c0_64, %c0_65, %c32] : memref<1x1x100xf32, #tpu.memory_space<smem>>
    %c0_66 = arith.constant 0 : index
    %c0_67 = arith.constant 0 : index
    %c33 = arith.constant 33 : index
    %33 = memref.load %arg3[%c0_66, %c0_67, %c33] : memref<1x1x100xf32, #tpu.memory_space<smem>>
    %c0_68 = arith.constant 0 : index
    %c0_69 = arith.constant 0 : index
    %c34 = arith.constant 34 : index
    %34 = memref.load %arg3[%c0_68, %c0_69, %c34] : memref<1x1x100xf32, #tpu.memory_space<smem>>
    %c0_70 = arith.constant 0 : index
    %c0_71 = arith.constant 0 : index
    %c35 = arith.constant 35 : index
    %35 = memref.load %arg3[%c0_70, %c0_71, %c35] : memref<1x1x100xf32, #tpu.memory_space<smem>>
    %c0_72 = arith.constant 0 : index
    %c0_73 = arith.constant 0 : index
    %c36 = arith.constant 36 : index
    %36 = memref.load %arg3[%c0_72, %c0_73, %c36] : memref<1x1x100xf32, #tpu.memory_space<smem>>
    %c0_74 = arith.constant 0 : index
    %c0_75 = arith.constant 0 : index
    %c37 = arith.constant 37 : index
    %37 = memref.load %arg3[%c0_74, %c0_75, %c37] : memref<1x1x100xf32, #tpu.memory_space<smem>>
    %c0_76 = arith.constant 0 : index
    %c0_77 = arith.constant 0 : index
    %c38 = arith.constant 38 : index
    %38 = memref.load %arg3[%c0_76, %c0_77, %c38] : memref<1x1x100xf32, #tpu.memory_space<smem>>
    %c0_78 = arith.constant 0 : index
    %c0_79 = arith.constant 0 : index
    %c39 = arith.constant 39 : index
    %39 = memref.load %arg3[%c0_78, %c0_79, %c39] : memref<1x1x100xf32, #tpu.memory_space<smem>>
    %c0_80 = arith.constant 0 : index
    %c0_81 = arith.constant 0 : index
    %c40 = arith.constant 40 : index
    %40 = memref.load %arg3[%c0_80, %c0_81, %c40] : memref<1x1x100xf32, #tpu.memory_space<smem>>
    %c0_82 = arith.constant 0 : index
    %c0_83 = arith.constant 0 : index
    %c41 = arith.constant 41 : index
    %41 = memref.load %arg3[%c0_82, %c0_83, %c41] : memref<1x1x100xf32, #tpu.memory_space<smem>>
    %c0_84 = arith.constant 0 : index
    %c0_85 = arith.constant 0 : index
    %c42 = arith.constant 42 : index
    %42 = memref.load %arg3[%c0_84, %c0_85, %c42] : memref<1x1x100xf32, #tpu.memory_space<smem>>
    %c0_86 = arith.constant 0 : index
    %c0_87 = arith.constant 0 : index
    %c43 = arith.constant 43 : index
    %43 = memref.load %arg3[%c0_86, %c0_87, %c43] : memref<1x1x100xf32, #tpu.memory_space<smem>>
    %c0_88 = arith.constant 0 : index
    %c0_89 = arith.constant 0 : index
    %c44 = arith.constant 44 : index
    %44 = memref.load %arg3[%c0_88, %c0_89, %c44] : memref<1x1x100xf32, #tpu.memory_space<smem>>
    %c0_90 = arith.constant 0 : index
    %c0_91 = arith.constant 0 : index
    %c45 = arith.constant 45 : index
    %45 = memref.load %arg3[%c0_90, %c0_91, %c45] : memref<1x1x100xf32, #tpu.memory_space<smem>>
    %c0_92 = arith.constant 0 : index
    %c0_93 = arith.constant 0 : index
    %c46 = arith.constant 46 : index
    %46 = memref.load %arg3[%c0_92, %c0_93, %c46] : memref<1x1x100xf32, #tpu.memory_space<smem>>
    %c0_94 = arith.constant 0 : index
    %c0_95 = arith.constant 0 : index
    %c47 = arith.constant 47 : index
    %47 = memref.load %arg3[%c0_94, %c0_95, %c47] : memref<1x1x100xf32, #tpu.memory_space<smem>>
    %c0_96 = arith.constant 0 : index
    %c0_97 = arith.constant 0 : index
    %c48 = arith.constant 48 : index
    %48 = memref.load %arg3[%c0_96, %c0_97, %c48] : memref<1x1x100xf32, #tpu.memory_space<smem>>
    %c0_98 = arith.constant 0 : index
    %c0_99 = arith.constant 0 : index
    %c49 = arith.constant 49 : index
    %49 = memref.load %arg3[%c0_98, %c0_99, %c49] : memref<1x1x100xf32, #tpu.memory_space<smem>>
    %c0_100 = arith.constant 0 : index
    %c0_101 = arith.constant 0 : index
    %c50 = arith.constant 50 : index
    %50 = memref.load %arg3[%c0_100, %c0_101, %c50] : memref<1x1x100xf32, #tpu.memory_space<smem>>
    %c0_102 = arith.constant 0 : index
    %c0_103 = arith.constant 0 : index
    %c51 = arith.constant 51 : index
    %51 = memref.load %arg3[%c0_102, %c0_103, %c51] : memref<1x1x100xf32, #tpu.memory_space<smem>>
    %c0_104 = arith.constant 0 : index
    %c0_105 = arith.constant 0 : index
    %c52 = arith.constant 52 : index
    %52 = memref.load %arg3[%c0_104, %c0_105, %c52] : memref<1x1x100xf32, #tpu.memory_space<smem>>
    %c0_106 = arith.constant 0 : index
    %c0_107 = arith.constant 0 : index
    %c53 = arith.constant 53 : index
    %53 = memref.load %arg3[%c0_106, %c0_107, %c53] : memref<1x1x100xf32, #tpu.memory_space<smem>>
    %c0_108 = arith.constant 0 : index
    %c0_109 = arith.constant 0 : index
    %c54 = arith.constant 54 : index
    %54 = memref.load %arg3[%c0_108, %c0_109, %c54] : memref<1x1x100xf32, #tpu.memory_space<smem>>
    %c0_110 = arith.constant 0 : index
    %c0_111 = arith.constant 0 : index
    %c55 = arith.constant 55 : index
    %55 = memref.load %arg3[%c0_110, %c0_111, %c55] : memref<1x1x100xf32, #tpu.memory_space<smem>>
    %c0_112 = arith.constant 0 : index
    %c0_113 = arith.constant 0 : index
    %c56 = arith.constant 56 : index
    %56 = memref.load %arg3[%c0_112, %c0_113, %c56] : memref<1x1x100xf32, #tpu.memory_space<smem>>
    %c0_114 = arith.constant 0 : index
    %c0_115 = arith.constant 0 : index
    %c57 = arith.constant 57 : index
    %57 = memref.load %arg3[%c0_114, %c0_115, %c57] : memref<1x1x100xf32, #tpu.memory_space<smem>>
    %c0_116 = arith.constant 0 : index
    %c0_117 = arith.constant 0 : index
    %c58 = arith.constant 58 : index
    %58 = memref.load %arg3[%c0_116, %c0_117, %c58] : memref<1x1x100xf32, #tpu.memory_space<smem>>
    %c0_118 = arith.constant 0 : index
    %c0_119 = arith.constant 0 : index
    %c59 = arith.constant 59 : index
    %59 = memref.load %arg3[%c0_118, %c0_119, %c59] : memref<1x1x100xf32, #tpu.memory_space<smem>>
    %c0_120 = arith.constant 0 : index
    %c0_121 = arith.constant 0 : index
    %c60 = arith.constant 60 : index
    %60 = memref.load %arg3[%c0_120, %c0_121, %c60] : memref<1x1x100xf32, #tpu.memory_space<smem>>
    %c0_122 = arith.constant 0 : index
    %c0_123 = arith.constant 0 : index
    %c61 = arith.constant 61 : index
    %61 = memref.load %arg3[%c0_122, %c0_123, %c61] : memref<1x1x100xf32, #tpu.memory_space<smem>>
    %c0_124 = arith.constant 0 : index
    %c0_125 = arith.constant 0 : index
    %c62 = arith.constant 62 : index
    %62 = memref.load %arg3[%c0_124, %c0_125, %c62] : memref<1x1x100xf32, #tpu.memory_space<smem>>
    %c0_126 = arith.constant 0 : index
    %c0_127 = arith.constant 0 : index
    %c63 = arith.constant 63 : index
    %63 = memref.load %arg3[%c0_126, %c0_127, %c63] : memref<1x1x100xf32, #tpu.memory_space<smem>>
    %c0_128 = arith.constant 0 : index
    %c0_129 = arith.constant 0 : index
    %c64 = arith.constant 64 : index
    %64 = memref.load %arg3[%c0_128, %c0_129, %c64] : memref<1x1x100xf32, #tpu.memory_space<smem>>
    %c0_130 = arith.constant 0 : index
    %c0_131 = arith.constant 0 : index
    %c65 = arith.constant 65 : index
    %65 = memref.load %arg3[%c0_130, %c0_131, %c65] : memref<1x1x100xf32, #tpu.memory_space<smem>>
    %c0_132 = arith.constant 0 : index
    %c0_133 = arith.constant 0 : index
    %c66 = arith.constant 66 : index
    %66 = memref.load %arg3[%c0_132, %c0_133, %c66] : memref<1x1x100xf32, #tpu.memory_space<smem>>
    %c0_134 = arith.constant 0 : index
    %c0_135 = arith.constant 0 : index
    %c67 = arith.constant 67 : index
    %67 = memref.load %arg3[%c0_134, %c0_135, %c67] : memref<1x1x100xf32, #tpu.memory_space<smem>>
    %c0_136 = arith.constant 0 : index
    %c0_137 = arith.constant 0 : index
    %c68 = arith.constant 68 : index
    %68 = memref.load %arg3[%c0_136, %c0_137, %c68] : memref<1x1x100xf32, #tpu.memory_space<smem>>
    %c0_138 = arith.constant 0 : index
    %c0_139 = arith.constant 0 : index
    %c69 = arith.constant 69 : index
    %69 = memref.load %arg3[%c0_138, %c0_139, %c69] : memref<1x1x100xf32, #tpu.memory_space<smem>>
    %c0_140 = arith.constant 0 : index
    %c0_141 = arith.constant 0 : index
    %c70 = arith.constant 70 : index
    %70 = memref.load %arg3[%c0_140, %c0_141, %c70] : memref<1x1x100xf32, #tpu.memory_space<smem>>
    %c0_142 = arith.constant 0 : index
    %c0_143 = arith.constant 0 : index
    %c71 = arith.constant 71 : index
    %71 = memref.load %arg3[%c0_142, %c0_143, %c71] : memref<1x1x100xf32, #tpu.memory_space<smem>>
    %c0_144 = arith.constant 0 : index
    %c0_145 = arith.constant 0 : index
    %c72 = arith.constant 72 : index
    %72 = memref.load %arg3[%c0_144, %c0_145, %c72] : memref<1x1x100xf32, #tpu.memory_space<smem>>
    %c0_146 = arith.constant 0 : index
    %c0_147 = arith.constant 0 : index
    %c73 = arith.constant 73 : index
    %73 = memref.load %arg3[%c0_146, %c0_147, %c73] : memref<1x1x100xf32, #tpu.memory_space<smem>>
    %c0_148 = arith.constant 0 : index
    %c0_149 = arith.constant 0 : index
    %c74 = arith.constant 74 : index
    %74 = memref.load %arg3[%c0_148, %c0_149, %c74] : memref<1x1x100xf32, #tpu.memory_space<smem>>
    %c0_150 = arith.constant 0 : index
    %c0_151 = arith.constant 0 : index
    %c75 = arith.constant 75 : index
    %75 = memref.load %arg3[%c0_150, %c0_151, %c75] : memref<1x1x100xf32, #tpu.memory_space<smem>>
    %c0_152 = arith.constant 0 : index
    %c0_153 = arith.constant 0 : index
    %c76 = arith.constant 76 : index
    %76 = memref.load %arg3[%c0_152, %c0_153, %c76] : memref<1x1x100xf32, #tpu.memory_space<smem>>
    %c0_154 = arith.constant 0 : index
    %c0_155 = arith.constant 0 : index
    %c77 = arith.constant 77 : index
    %77 = memref.load %arg3[%c0_154, %c0_155, %c77] : memref<1x1x100xf32, #tpu.memory_space<smem>>
    %c0_156 = arith.constant 0 : index
    %c0_157 = arith.constant 0 : index
    %c78 = arith.constant 78 : index
    %78 = memref.load %arg3[%c0_156, %c0_157, %c78] : memref<1x1x100xf32, #tpu.memory_space<smem>>
    %c0_158 = arith.constant 0 : index
    %c0_159 = arith.constant 0 : index
    %c79 = arith.constant 79 : index
    %79 = memref.load %arg3[%c0_158, %c0_159, %c79] : memref<1x1x100xf32, #tpu.memory_space<smem>>
    %c0_160 = arith.constant 0 : index
    %c0_161 = arith.constant 0 : index
    %c80 = arith.constant 80 : index
    %80 = memref.load %arg3[%c0_160, %c0_161, %c80] : memref<1x1x100xf32, #tpu.memory_space<smem>>
    %c0_162 = arith.constant 0 : index
    %c0_163 = arith.constant 0 : index
    %c81 = arith.constant 81 : index
    %81 = memref.load %arg3[%c0_162, %c0_163, %c81] : memref<1x1x100xf32, #tpu.memory_space<smem>>
    %c0_164 = arith.constant 0 : index
    %c0_165 = arith.constant 0 : index
    %c82 = arith.constant 82 : index
    %82 = memref.load %arg3[%c0_164, %c0_165, %c82] : memref<1x1x100xf32, #tpu.memory_space<smem>>
    %c0_166 = arith.constant 0 : index
    %c0_167 = arith.constant 0 : index
    %c83 = arith.constant 83 : index
    %83 = memref.load %arg3[%c0_166, %c0_167, %c83] : memref<1x1x100xf32, #tpu.memory_space<smem>>
    %c0_168 = arith.constant 0 : index
    %c0_169 = arith.constant 0 : index
    %c84 = arith.constant 84 : index
    %84 = memref.load %arg3[%c0_168, %c0_169, %c84] : memref<1x1x100xf32, #tpu.memory_space<smem>>
    %c0_170 = arith.constant 0 : index
    %c0_171 = arith.constant 0 : index
    %c85 = arith.constant 85 : index
    %85 = memref.load %arg3[%c0_170, %c0_171, %c85] : memref<1x1x100xf32, #tpu.memory_space<smem>>
    %c0_172 = arith.constant 0 : index
    %c0_173 = arith.constant 0 : index
    %c86 = arith.constant 86 : index
    %86 = memref.load %arg3[%c0_172, %c0_173, %c86] : memref<1x1x100xf32, #tpu.memory_space<smem>>
    %c0_174 = arith.constant 0 : index
    %c0_175 = arith.constant 0 : index
    %c87 = arith.constant 87 : index
    %87 = memref.load %arg3[%c0_174, %c0_175, %c87] : memref<1x1x100xf32, #tpu.memory_space<smem>>
    %c0_176 = arith.constant 0 : index
    %c0_177 = arith.constant 0 : index
    %c88 = arith.constant 88 : index
    %88 = memref.load %arg3[%c0_176, %c0_177, %c88] : memref<1x1x100xf32, #tpu.memory_space<smem>>
    %c0_178 = arith.constant 0 : index
    %c0_179 = arith.constant 0 : index
    %c89 = arith.constant 89 : index
    %89 = memref.load %arg3[%c0_178, %c0_179, %c89] : memref<1x1x100xf32, #tpu.memory_space<smem>>
    %c0_180 = arith.constant 0 : index
    %c0_181 = arith.constant 0 : index
    %c90 = arith.constant 90 : index
    %90 = memref.load %arg3[%c0_180, %c0_181, %c90] : memref<1x1x100xf32, #tpu.memory_space<smem>>
    %c0_182 = arith.constant 0 : index
    %c0_183 = arith.constant 0 : index
    %c91 = arith.constant 91 : index
    %91 = memref.load %arg3[%c0_182, %c0_183, %c91] : memref<1x1x100xf32, #tpu.memory_space<smem>>
    %c0_184 = arith.constant 0 : index
    %c0_185 = arith.constant 0 : index
    %c92 = arith.constant 92 : index
    %92 = memref.load %arg3[%c0_184, %c0_185, %c92] : memref<1x1x100xf32, #tpu.memory_space<smem>>
    %c0_186 = arith.constant 0 : index
    %c0_187 = arith.constant 0 : index
    %c93 = arith.constant 93 : index
    %93 = memref.load %arg3[%c0_186, %c0_187, %c93] : memref<1x1x100xf32, #tpu.memory_space<smem>>
    %c0_188 = arith.constant 0 : index
    %c0_189 = arith.constant 0 : index
    %c94 = arith.constant 94 : index
    %94 = memref.load %arg3[%c0_188, %c0_189, %c94] : memref<1x1x100xf32, #tpu.memory_space<smem>>
    %c0_190 = arith.constant 0 : index
    %c0_191 = arith.constant 0 : index
    %c95 = arith.constant 95 : index
    %95 = memref.load %arg3[%c0_190, %c0_191, %c95] : memref<1x1x100xf32, #tpu.memory_space<smem>>
    %c0_192 = arith.constant 0 : index
    %c0_193 = arith.constant 0 : index
    %c96 = arith.constant 96 : index
    %96 = memref.load %arg3[%c0_192, %c0_193, %c96] : memref<1x1x100xf32, #tpu.memory_space<smem>>
    %c0_194 = arith.constant 0 : index
    %c0_195 = arith.constant 0 : index
    %c97 = arith.constant 97 : index
    %97 = memref.load %arg3[%c0_194, %c0_195, %c97] : memref<1x1x100xf32, #tpu.memory_space<smem>>
    %c0_196 = arith.constant 0 : index
    %c0_197 = arith.constant 0 : index
    %c98 = arith.constant 98 : index
    %98 = memref.load %arg3[%c0_196, %c0_197, %c98] : memref<1x1x100xf32, #tpu.memory_space<smem>>
    %c0_198 = arith.constant 0 : index
    %c0_199 = arith.constant 0 : index
    %c99 = arith.constant 99 : index
    %99 = memref.load %arg3[%c0_198, %c0_199, %c99] : memref<1x1x100xf32, #tpu.memory_space<smem>>
    %c0_200 = arith.constant 0 : index
    %c0_201 = arith.constant 0 : index
    %c0_202 = arith.constant 0 : index
    %c0_203 = arith.constant 0 : index
    %100 = vector.load %arg4[%c0_200, %c0_201, %c0_202, %c0_203] : memref<1x1x2x128xf32, #tpu.memory_space<vmem>>, vector<1x1x2x128xf32>
    %101 = vector.shape_cast %100 : vector<1x1x2x128xf32> to vector<2x128xf32>
    %cst = arith.constant 0.74999994 : f32
    %102 = vector.broadcast %cst : f32 to vector<2x128xf32>
    %103 = arith.mulf %101, %102 : vector<2x128xf32>
    %c0_204 = arith.constant 0 : index
    %c0_205 = arith.constant 0 : index
    %c0_206 = arith.constant 0 : index
    %c0_207 = arith.constant 0 : index
    %104 = vector.load %arg5[%c0_204, %c0_205, %c0_206, %c0_207] : memref<1x1x2x128xf32, #tpu.memory_space<vmem>>, vector<1x1x2x128xf32>
    %105 = vector.shape_cast %104 : vector<1x1x2x128xf32> to vector<2x128xf32>
    %cst_208 = arith.constant 0.74999994 : f32
    %106 = vector.broadcast %cst_208 : f32 to vector<2x128xf32>
    %107 = arith.mulf %105, %106 : vector<2x128xf32>
    %cst_209 = arith.constant -2.24999976 : f32
    %108 = vector.broadcast %cst_209 : f32 to vector<2x128xf32>
    %109 = arith.subf %103, %108 : vector<2x128xf32>
    %110 = arith.mulf %109, %109 : vector<2x128xf32>
    %cst_210 = arith.constant 0.000000e+00 : f32
    %111 = vector.broadcast %cst_210 : f32 to vector<2x128xf32>
    %112 = arith.subf %111, %110 : vector<2x128xf32>
    %113 = math.exp %112 : vector<2x128xf32>
    %cst_211 = arith.constant -1.74999976 : f32
    %114 = vector.broadcast %cst_211 : f32 to vector<2x128xf32>
    %115 = arith.subf %103, %114 : vector<2x128xf32>
    %116 = arith.mulf %115, %115 : vector<2x128xf32>
    %cst_212 = arith.constant 0.000000e+00 : f32
    %117 = vector.broadcast %cst_212 : f32 to vector<2x128xf32>
    %118 = arith.subf %117, %116 : vector<2x128xf32>
    %119 = math.exp %118 : vector<2x128xf32>
    %cst_213 = arith.constant -1.24999988 : f32
    %120 = vector.broadcast %cst_213 : f32 to vector<2x128xf32>
    %121 = arith.subf %103, %120 : vector<2x128xf32>
    %122 = arith.mulf %121, %121 : vector<2x128xf32>
    %cst_214 = arith.constant 0.000000e+00 : f32
    %123 = vector.broadcast %cst_214 : f32 to vector<2x128xf32>
    %124 = arith.subf %123, %122 : vector<2x128xf32>
    %125 = math.exp %124 : vector<2x128xf32>
    %cst_215 = arith.constant -0.74999994 : f32
    %126 = vector.broadcast %cst_215 : f32 to vector<2x128xf32>
    %127 = arith.subf %103, %126 : vector<2x128xf32>
    %128 = arith.mulf %127, %127 : vector<2x128xf32>
    %cst_216 = arith.constant 0.000000e+00 : f32
    %129 = vector.broadcast %cst_216 : f32 to vector<2x128xf32>
    %130 = arith.subf %129, %128 : vector<2x128xf32>
    %131 = math.exp %130 : vector<2x128xf32>
    %cst_217 = arith.constant -0.249999985 : f32
    %132 = vector.broadcast %cst_217 : f32 to vector<2x128xf32>
    %133 = arith.subf %103, %132 : vector<2x128xf32>
    %134 = arith.mulf %133, %133 : vector<2x128xf32>
    %cst_218 = arith.constant 0.000000e+00 : f32
    %135 = vector.broadcast %cst_218 : f32 to vector<2x128xf32>
    %136 = arith.subf %135, %134 : vector<2x128xf32>
    %137 = math.exp %136 : vector<2x128xf32>
    %cst_219 = arith.constant 0.249999985 : f32
    %138 = vector.broadcast %cst_219 : f32 to vector<2x128xf32>
    %139 = arith.subf %103, %138 : vector<2x128xf32>
    %140 = arith.mulf %139, %139 : vector<2x128xf32>
    %cst_220 = arith.constant 0.000000e+00 : f32
    %141 = vector.broadcast %cst_220 : f32 to vector<2x128xf32>
    %142 = arith.subf %141, %140 : vector<2x128xf32>
    %143 = math.exp %142 : vector<2x128xf32>
    %cst_221 = arith.constant 0.74999994 : f32
    %144 = vector.broadcast %cst_221 : f32 to vector<2x128xf32>
    %145 = arith.subf %103, %144 : vector<2x128xf32>
    %146 = arith.mulf %145, %145 : vector<2x128xf32>
    %cst_222 = arith.constant 0.000000e+00 : f32
    %147 = vector.broadcast %cst_222 : f32 to vector<2x128xf32>
    %148 = arith.subf %147, %146 : vector<2x128xf32>
    %149 = math.exp %148 : vector<2x128xf32>
    %cst_223 = arith.constant 1.24999988 : f32
    %150 = vector.broadcast %cst_223 : f32 to vector<2x128xf32>
    %151 = arith.subf %103, %150 : vector<2x128xf32>
    %152 = arith.mulf %151, %151 : vector<2x128xf32>
    %cst_224 = arith.constant 0.000000e+00 : f32
    %153 = vector.broadcast %cst_224 : f32 to vector<2x128xf32>
    %154 = arith.subf %153, %152 : vector<2x128xf32>
    %155 = math.exp %154 : vector<2x128xf32>
    %cst_225 = arith.constant 1.74999976 : f32
    %156 = vector.broadcast %cst_225 : f32 to vector<2x128xf32>
    %157 = arith.subf %103, %156 : vector<2x128xf32>
    %158 = arith.mulf %157, %157 : vector<2x128xf32>
    %cst_226 = arith.constant 0.000000e+00 : f32
    %159 = vector.broadcast %cst_226 : f32 to vector<2x128xf32>
    %160 = arith.subf %159, %158 : vector<2x128xf32>
    %161 = math.exp %160 : vector<2x128xf32>
    %cst_227 = arith.constant 2.24999976 : f32
    %162 = vector.broadcast %cst_227 : f32 to vector<2x128xf32>
    %163 = arith.subf %103, %162 : vector<2x128xf32>
    %164 = arith.mulf %163, %163 : vector<2x128xf32>
    %cst_228 = arith.constant 0.000000e+00 : f32
    %165 = vector.broadcast %cst_228 : f32 to vector<2x128xf32>
    %166 = arith.subf %165, %164 : vector<2x128xf32>
    %167 = math.exp %166 : vector<2x128xf32>
    %cst_229 = arith.constant -2.24999976 : f32
    %168 = vector.broadcast %cst_229 : f32 to vector<2x128xf32>
    %169 = arith.subf %107, %168 : vector<2x128xf32>
    %170 = arith.mulf %169, %169 : vector<2x128xf32>
    %cst_230 = arith.constant 0.000000e+00 : f32
    %171 = vector.broadcast %cst_230 : f32 to vector<2x128xf32>
    %172 = arith.subf %171, %170 : vector<2x128xf32>
    %173 = math.exp %172 : vector<2x128xf32>
    %174 = vector.broadcast %0 : f32 to vector<2x128xf32>
    %175 = arith.mulf %113, %174 : vector<2x128xf32>
    %176 = vector.broadcast %1 : f32 to vector<2x128xf32>
    %177 = arith.mulf %119, %176 : vector<2x128xf32>
    %178 = vector.broadcast %2 : f32 to vector<2x128xf32>
    %179 = arith.mulf %125, %178 : vector<2x128xf32>
    %180 = arith.addf %175, %179 : vector<2x128xf32>
    %181 = vector.broadcast %3 : f32 to vector<2x128xf32>
    %182 = arith.mulf %131, %181 : vector<2x128xf32>
    %183 = arith.addf %177, %182 : vector<2x128xf32>
    %184 = vector.broadcast %4 : f32 to vector<2x128xf32>
    %185 = arith.mulf %137, %184 : vector<2x128xf32>
    %186 = arith.addf %180, %185 : vector<2x128xf32>
    %187 = vector.broadcast %5 : f32 to vector<2x128xf32>
    %188 = arith.mulf %143, %187 : vector<2x128xf32>
    %189 = arith.addf %183, %188 : vector<2x128xf32>
    %190 = vector.broadcast %6 : f32 to vector<2x128xf32>
    %191 = arith.mulf %149, %190 : vector<2x128xf32>
    %192 = arith.addf %186, %191 : vector<2x128xf32>
    %193 = vector.broadcast %7 : f32 to vector<2x128xf32>
    %194 = arith.mulf %155, %193 : vector<2x128xf32>
    %195 = arith.addf %189, %194 : vector<2x128xf32>
    %196 = vector.broadcast %8 : f32 to vector<2x128xf32>
    %197 = arith.mulf %161, %196 : vector<2x128xf32>
    %198 = arith.addf %192, %197 : vector<2x128xf32>
    %199 = vector.broadcast %9 : f32 to vector<2x128xf32>
    %200 = arith.mulf %167, %199 : vector<2x128xf32>
    %201 = arith.addf %195, %200 : vector<2x128xf32>
    %202 = arith.addf %198, %201 : vector<2x128xf32>
    %203 = arith.mulf %173, %202 : vector<2x128xf32>
    %cst_231 = arith.constant -1.74999976 : f32
    %204 = vector.broadcast %cst_231 : f32 to vector<2x128xf32>
    %205 = arith.subf %107, %204 : vector<2x128xf32>
    %206 = arith.mulf %205, %205 : vector<2x128xf32>
    %cst_232 = arith.constant 0.000000e+00 : f32
    %207 = vector.broadcast %cst_232 : f32 to vector<2x128xf32>
    %208 = arith.subf %207, %206 : vector<2x128xf32>
    %209 = math.exp %208 : vector<2x128xf32>
    %210 = vector.broadcast %10 : f32 to vector<2x128xf32>
    %211 = arith.mulf %113, %210 : vector<2x128xf32>
    %212 = vector.broadcast %11 : f32 to vector<2x128xf32>
    %213 = arith.mulf %119, %212 : vector<2x128xf32>
    %214 = vector.broadcast %12 : f32 to vector<2x128xf32>
    %215 = arith.mulf %125, %214 : vector<2x128xf32>
    %216 = arith.addf %211, %215 : vector<2x128xf32>
    %217 = vector.broadcast %13 : f32 to vector<2x128xf32>
    %218 = arith.mulf %131, %217 : vector<2x128xf32>
    %219 = arith.addf %213, %218 : vector<2x128xf32>
    %220 = vector.broadcast %14 : f32 to vector<2x128xf32>
    %221 = arith.mulf %137, %220 : vector<2x128xf32>
    %222 = arith.addf %216, %221 : vector<2x128xf32>
    %223 = vector.broadcast %15 : f32 to vector<2x128xf32>
    %224 = arith.mulf %143, %223 : vector<2x128xf32>
    %225 = arith.addf %219, %224 : vector<2x128xf32>
    %226 = vector.broadcast %16 : f32 to vector<2x128xf32>
    %227 = arith.mulf %149, %226 : vector<2x128xf32>
    %228 = arith.addf %222, %227 : vector<2x128xf32>
    %229 = vector.broadcast %17 : f32 to vector<2x128xf32>
    %230 = arith.mulf %155, %229 : vector<2x128xf32>
    %231 = arith.addf %225, %230 : vector<2x128xf32>
    %232 = vector.broadcast %18 : f32 to vector<2x128xf32>
    %233 = arith.mulf %161, %232 : vector<2x128xf32>
    %234 = arith.addf %228, %233 : vector<2x128xf32>
    %235 = vector.broadcast %19 : f32 to vector<2x128xf32>
    %236 = arith.mulf %167, %235 : vector<2x128xf32>
    %237 = arith.addf %231, %236 : vector<2x128xf32>
    %238 = arith.addf %234, %237 : vector<2x128xf32>
    %239 = arith.mulf %209, %238 : vector<2x128xf32>
    %cst_233 = arith.constant -1.24999988 : f32
    %240 = vector.broadcast %cst_233 : f32 to vector<2x128xf32>
    %241 = arith.subf %107, %240 : vector<2x128xf32>
    %242 = arith.mulf %241, %241 : vector<2x128xf32>
    %cst_234 = arith.constant 0.000000e+00 : f32
    %243 = vector.broadcast %cst_234 : f32 to vector<2x128xf32>
    %244 = arith.subf %243, %242 : vector<2x128xf32>
    %245 = math.exp %244 : vector<2x128xf32>
    %246 = vector.broadcast %20 : f32 to vector<2x128xf32>
    %247 = arith.mulf %113, %246 : vector<2x128xf32>
    %248 = vector.broadcast %21 : f32 to vector<2x128xf32>
    %249 = arith.mulf %119, %248 : vector<2x128xf32>
    %250 = vector.broadcast %22 : f32 to vector<2x128xf32>
    %251 = arith.mulf %125, %250 : vector<2x128xf32>
    %252 = arith.addf %247, %251 : vector<2x128xf32>
    %253 = vector.broadcast %23 : f32 to vector<2x128xf32>
    %254 = arith.mulf %131, %253 : vector<2x128xf32>
    %255 = arith.addf %249, %254 : vector<2x128xf32>
    %256 = vector.broadcast %24 : f32 to vector<2x128xf32>
    %257 = arith.mulf %137, %256 : vector<2x128xf32>
    %258 = arith.addf %252, %257 : vector<2x128xf32>
    %259 = vector.broadcast %25 : f32 to vector<2x128xf32>
    %260 = arith.mulf %143, %259 : vector<2x128xf32>
    %261 = arith.addf %255, %260 : vector<2x128xf32>
    %262 = vector.broadcast %26 : f32 to vector<2x128xf32>
    %263 = arith.mulf %149, %262 : vector<2x128xf32>
    %264 = arith.addf %258, %263 : vector<2x128xf32>
    %265 = vector.broadcast %27 : f32 to vector<2x128xf32>
    %266 = arith.mulf %155, %265 : vector<2x128xf32>
    %267 = arith.addf %261, %266 : vector<2x128xf32>
    %268 = vector.broadcast %28 : f32 to vector<2x128xf32>
    %269 = arith.mulf %161, %268 : vector<2x128xf32>
    %270 = arith.addf %264, %269 : vector<2x128xf32>
    %271 = vector.broadcast %29 : f32 to vector<2x128xf32>
    %272 = arith.mulf %167, %271 : vector<2x128xf32>
    %273 = arith.addf %267, %272 : vector<2x128xf32>
    %274 = arith.addf %270, %273 : vector<2x128xf32>
    %275 = arith.mulf %245, %274 : vector<2x128xf32>
    %276 = arith.addf %203, %275 : vector<2x128xf32>
    %cst_235 = arith.constant -0.74999994 : f32
    %277 = vector.broadcast %cst_235 : f32 to vector<2x128xf32>
    %278 = arith.subf %107, %277 : vector<2x128xf32>
    %279 = arith.mulf %278, %278 : vector<2x128xf32>
    %cst_236 = arith.constant 0.000000e+00 : f32
    %280 = vector.broadcast %cst_236 : f32 to vector<2x128xf32>
    %281 = arith.subf %280, %279 : vector<2x128xf32>
    %282 = math.exp %281 : vector<2x128xf32>
    %283 = vector.broadcast %30 : f32 to vector<2x128xf32>
    %284 = arith.mulf %113, %283 : vector<2x128xf32>
    %285 = vector.broadcast %31 : f32 to vector<2x128xf32>
    %286 = arith.mulf %119, %285 : vector<2x128xf32>
    %287 = vector.broadcast %32 : f32 to vector<2x128xf32>
    %288 = arith.mulf %125, %287 : vector<2x128xf32>
    %289 = arith.addf %284, %288 : vector<2x128xf32>
    %290 = vector.broadcast %33 : f32 to vector<2x128xf32>
    %291 = arith.mulf %131, %290 : vector<2x128xf32>
    %292 = arith.addf %286, %291 : vector<2x128xf32>
    %293 = vector.broadcast %34 : f32 to vector<2x128xf32>
    %294 = arith.mulf %137, %293 : vector<2x128xf32>
    %295 = arith.addf %289, %294 : vector<2x128xf32>
    %296 = vector.broadcast %35 : f32 to vector<2x128xf32>
    %297 = arith.mulf %143, %296 : vector<2x128xf32>
    %298 = arith.addf %292, %297 : vector<2x128xf32>
    %299 = vector.broadcast %36 : f32 to vector<2x128xf32>
    %300 = arith.mulf %149, %299 : vector<2x128xf32>
    %301 = arith.addf %295, %300 : vector<2x128xf32>
    %302 = vector.broadcast %37 : f32 to vector<2x128xf32>
    %303 = arith.mulf %155, %302 : vector<2x128xf32>
    %304 = arith.addf %298, %303 : vector<2x128xf32>
    %305 = vector.broadcast %38 : f32 to vector<2x128xf32>
    %306 = arith.mulf %161, %305 : vector<2x128xf32>
    %307 = arith.addf %301, %306 : vector<2x128xf32>
    %308 = vector.broadcast %39 : f32 to vector<2x128xf32>
    %309 = arith.mulf %167, %308 : vector<2x128xf32>
    %310 = arith.addf %304, %309 : vector<2x128xf32>
    %311 = arith.addf %307, %310 : vector<2x128xf32>
    %312 = arith.mulf %282, %311 : vector<2x128xf32>
    %313 = arith.addf %239, %312 : vector<2x128xf32>
    %cst_237 = arith.constant -0.249999985 : f32
    %314 = vector.broadcast %cst_237 : f32 to vector<2x128xf32>
    %315 = arith.subf %107, %314 : vector<2x128xf32>
    %316 = arith.mulf %315, %315 : vector<2x128xf32>
    %cst_238 = arith.constant 0.000000e+00 : f32
    %317 = vector.broadcast %cst_238 : f32 to vector<2x128xf32>
    %318 = arith.subf %317, %316 : vector<2x128xf32>
    %319 = math.exp %318 : vector<2x128xf32>
    %320 = vector.broadcast %40 : f32 to vector<2x128xf32>
    %321 = arith.mulf %113, %320 : vector<2x128xf32>
    %322 = vector.broadcast %41 : f32 to vector<2x128xf32>
    %323 = arith.mulf %119, %322 : vector<2x128xf32>
    %324 = vector.broadcast %42 : f32 to vector<2x128xf32>
    %325 = arith.mulf %125, %324 : vector<2x128xf32>
    %326 = arith.addf %321, %325 : vector<2x128xf32>
    %327 = vector.broadcast %43 : f32 to vector<2x128xf32>
    %328 = arith.mulf %131, %327 : vector<2x128xf32>
    %329 = arith.addf %323, %328 : vector<2x128xf32>
    %330 = vector.broadcast %44 : f32 to vector<2x128xf32>
    %331 = arith.mulf %137, %330 : vector<2x128xf32>
    %332 = arith.addf %326, %331 : vector<2x128xf32>
    %333 = vector.broadcast %45 : f32 to vector<2x128xf32>
    %334 = arith.mulf %143, %333 : vector<2x128xf32>
    %335 = arith.addf %329, %334 : vector<2x128xf32>
    %336 = vector.broadcast %46 : f32 to vector<2x128xf32>
    %337 = arith.mulf %149, %336 : vector<2x128xf32>
    %338 = arith.addf %332, %337 : vector<2x128xf32>
    %339 = vector.broadcast %47 : f32 to vector<2x128xf32>
    %340 = arith.mulf %155, %339 : vector<2x128xf32>
    %341 = arith.addf %335, %340 : vector<2x128xf32>
    %342 = vector.broadcast %48 : f32 to vector<2x128xf32>
    %343 = arith.mulf %161, %342 : vector<2x128xf32>
    %344 = arith.addf %338, %343 : vector<2x128xf32>
    %345 = vector.broadcast %49 : f32 to vector<2x128xf32>
    %346 = arith.mulf %167, %345 : vector<2x128xf32>
    %347 = arith.addf %341, %346 : vector<2x128xf32>
    %348 = arith.addf %344, %347 : vector<2x128xf32>
    %349 = arith.mulf %319, %348 : vector<2x128xf32>
    %350 = arith.addf %276, %349 : vector<2x128xf32>
    %cst_239 = arith.constant 0.249999985 : f32
    %351 = vector.broadcast %cst_239 : f32 to vector<2x128xf32>
    %352 = arith.subf %107, %351 : vector<2x128xf32>
    %353 = arith.mulf %352, %352 : vector<2x128xf32>
    %cst_240 = arith.constant 0.000000e+00 : f32
    %354 = vector.broadcast %cst_240 : f32 to vector<2x128xf32>
    %355 = arith.subf %354, %353 : vector<2x128xf32>
    %356 = math.exp %355 : vector<2x128xf32>
    %357 = vector.broadcast %50 : f32 to vector<2x128xf32>
    %358 = arith.mulf %113, %357 : vector<2x128xf32>
    %359 = vector.broadcast %51 : f32 to vector<2x128xf32>
    %360 = arith.mulf %119, %359 : vector<2x128xf32>
    %361 = vector.broadcast %52 : f32 to vector<2x128xf32>
    %362 = arith.mulf %125, %361 : vector<2x128xf32>
    %363 = arith.addf %358, %362 : vector<2x128xf32>
    %364 = vector.broadcast %53 : f32 to vector<2x128xf32>
    %365 = arith.mulf %131, %364 : vector<2x128xf32>
    %366 = arith.addf %360, %365 : vector<2x128xf32>
    %367 = vector.broadcast %54 : f32 to vector<2x128xf32>
    %368 = arith.mulf %137, %367 : vector<2x128xf32>
    %369 = arith.addf %363, %368 : vector<2x128xf32>
    %370 = vector.broadcast %55 : f32 to vector<2x128xf32>
    %371 = arith.mulf %143, %370 : vector<2x128xf32>
    %372 = arith.addf %366, %371 : vector<2x128xf32>
    %373 = vector.broadcast %56 : f32 to vector<2x128xf32>
    %374 = arith.mulf %149, %373 : vector<2x128xf32>
    %375 = arith.addf %369, %374 : vector<2x128xf32>
    %376 = vector.broadcast %57 : f32 to vector<2x128xf32>
    %377 = arith.mulf %155, %376 : vector<2x128xf32>
    %378 = arith.addf %372, %377 : vector<2x128xf32>
    %379 = vector.broadcast %58 : f32 to vector<2x128xf32>
    %380 = arith.mulf %161, %379 : vector<2x128xf32>
    %381 = arith.addf %375, %380 : vector<2x128xf32>
    %382 = vector.broadcast %59 : f32 to vector<2x128xf32>
    %383 = arith.mulf %167, %382 : vector<2x128xf32>
    %384 = arith.addf %378, %383 : vector<2x128xf32>
    %385 = arith.addf %381, %384 : vector<2x128xf32>
    %386 = arith.mulf %356, %385 : vector<2x128xf32>
    %387 = arith.addf %313, %386 : vector<2x128xf32>
    %cst_241 = arith.constant 0.74999994 : f32
    %388 = vector.broadcast %cst_241 : f32 to vector<2x128xf32>
    %389 = arith.subf %107, %388 : vector<2x128xf32>
    %390 = arith.mulf %389, %389 : vector<2x128xf32>
    %cst_242 = arith.constant 0.000000e+00 : f32
    %391 = vector.broadcast %cst_242 : f32 to vector<2x128xf32>
    %392 = arith.subf %391, %390 : vector<2x128xf32>
    %393 = math.exp %392 : vector<2x128xf32>
    %394 = vector.broadcast %60 : f32 to vector<2x128xf32>
    %395 = arith.mulf %113, %394 : vector<2x128xf32>
    %396 = vector.broadcast %61 : f32 to vector<2x128xf32>
    %397 = arith.mulf %119, %396 : vector<2x128xf32>
    %398 = vector.broadcast %62 : f32 to vector<2x128xf32>
    %399 = arith.mulf %125, %398 : vector<2x128xf32>
    %400 = arith.addf %395, %399 : vector<2x128xf32>
    %401 = vector.broadcast %63 : f32 to vector<2x128xf32>
    %402 = arith.mulf %131, %401 : vector<2x128xf32>
    %403 = arith.addf %397, %402 : vector<2x128xf32>
    %404 = vector.broadcast %64 : f32 to vector<2x128xf32>
    %405 = arith.mulf %137, %404 : vector<2x128xf32>
    %406 = arith.addf %400, %405 : vector<2x128xf32>
    %407 = vector.broadcast %65 : f32 to vector<2x128xf32>
    %408 = arith.mulf %143, %407 : vector<2x128xf32>
    %409 = arith.addf %403, %408 : vector<2x128xf32>
    %410 = vector.broadcast %66 : f32 to vector<2x128xf32>
    %411 = arith.mulf %149, %410 : vector<2x128xf32>
    %412 = arith.addf %406, %411 : vector<2x128xf32>
    %413 = vector.broadcast %67 : f32 to vector<2x128xf32>
    %414 = arith.mulf %155, %413 : vector<2x128xf32>
    %415 = arith.addf %409, %414 : vector<2x128xf32>
    %416 = vector.broadcast %68 : f32 to vector<2x128xf32>
    %417 = arith.mulf %161, %416 : vector<2x128xf32>
    %418 = arith.addf %412, %417 : vector<2x128xf32>
    %419 = vector.broadcast %69 : f32 to vector<2x128xf32>
    %420 = arith.mulf %167, %419 : vector<2x128xf32>
    %421 = arith.addf %415, %420 : vector<2x128xf32>
    %422 = arith.addf %418, %421 : vector<2x128xf32>
    %423 = arith.mulf %393, %422 : vector<2x128xf32>
    %424 = arith.addf %350, %423 : vector<2x128xf32>
    %cst_243 = arith.constant 1.24999988 : f32
    %425 = vector.broadcast %cst_243 : f32 to vector<2x128xf32>
    %426 = arith.subf %107, %425 : vector<2x128xf32>
    %427 = arith.mulf %426, %426 : vector<2x128xf32>
    %cst_244 = arith.constant 0.000000e+00 : f32
    %428 = vector.broadcast %cst_244 : f32 to vector<2x128xf32>
    %429 = arith.subf %428, %427 : vector<2x128xf32>
    %430 = math.exp %429 : vector<2x128xf32>
    %431 = vector.broadcast %70 : f32 to vector<2x128xf32>
    %432 = arith.mulf %113, %431 : vector<2x128xf32>
    %433 = vector.broadcast %71 : f32 to vector<2x128xf32>
    %434 = arith.mulf %119, %433 : vector<2x128xf32>
    %435 = vector.broadcast %72 : f32 to vector<2x128xf32>
    %436 = arith.mulf %125, %435 : vector<2x128xf32>
    %437 = arith.addf %432, %436 : vector<2x128xf32>
    %438 = vector.broadcast %73 : f32 to vector<2x128xf32>
    %439 = arith.mulf %131, %438 : vector<2x128xf32>
    %440 = arith.addf %434, %439 : vector<2x128xf32>
    %441 = vector.broadcast %74 : f32 to vector<2x128xf32>
    %442 = arith.mulf %137, %441 : vector<2x128xf32>
    %443 = arith.addf %437, %442 : vector<2x128xf32>
    %444 = vector.broadcast %75 : f32 to vector<2x128xf32>
    %445 = arith.mulf %143, %444 : vector<2x128xf32>
    %446 = arith.addf %440, %445 : vector<2x128xf32>
    %447 = vector.broadcast %76 : f32 to vector<2x128xf32>
    %448 = arith.mulf %149, %447 : vector<2x128xf32>
    %449 = arith.addf %443, %448 : vector<2x128xf32>
    %450 = vector.broadcast %77 : f32 to vector<2x128xf32>
    %451 = arith.mulf %155, %450 : vector<2x128xf32>
    %452 = arith.addf %446, %451 : vector<2x128xf32>
    %453 = vector.broadcast %78 : f32 to vector<2x128xf32>
    %454 = arith.mulf %161, %453 : vector<2x128xf32>
    %455 = arith.addf %449, %454 : vector<2x128xf32>
    %456 = vector.broadcast %79 : f32 to vector<2x128xf32>
    %457 = arith.mulf %167, %456 : vector<2x128xf32>
    %458 = arith.addf %452, %457 : vector<2x128xf32>
    %459 = arith.addf %455, %458 : vector<2x128xf32>
    %460 = arith.mulf %430, %459 : vector<2x128xf32>
    %461 = arith.addf %387, %460 : vector<2x128xf32>
    %cst_245 = arith.constant 1.74999976 : f32
    %462 = vector.broadcast %cst_245 : f32 to vector<2x128xf32>
    %463 = arith.subf %107, %462 : vector<2x128xf32>
    %464 = arith.mulf %463, %463 : vector<2x128xf32>
    %cst_246 = arith.constant 0.000000e+00 : f32
    %465 = vector.broadcast %cst_246 : f32 to vector<2x128xf32>
    %466 = arith.subf %465, %464 : vector<2x128xf32>
    %467 = math.exp %466 : vector<2x128xf32>
    %468 = vector.broadcast %80 : f32 to vector<2x128xf32>
    %469 = arith.mulf %113, %468 : vector<2x128xf32>
    %470 = vector.broadcast %81 : f32 to vector<2x128xf32>
    %471 = arith.mulf %119, %470 : vector<2x128xf32>
    %472 = vector.broadcast %82 : f32 to vector<2x128xf32>
    %473 = arith.mulf %125, %472 : vector<2x128xf32>
    %474 = arith.addf %469, %473 : vector<2x128xf32>
    %475 = vector.broadcast %83 : f32 to vector<2x128xf32>
    %476 = arith.mulf %131, %475 : vector<2x128xf32>
    %477 = arith.addf %471, %476 : vector<2x128xf32>
    %478 = vector.broadcast %84 : f32 to vector<2x128xf32>
    %479 = arith.mulf %137, %478 : vector<2x128xf32>
    %480 = arith.addf %474, %479 : vector<2x128xf32>
    %481 = vector.broadcast %85 : f32 to vector<2x128xf32>
    %482 = arith.mulf %143, %481 : vector<2x128xf32>
    %483 = arith.addf %477, %482 : vector<2x128xf32>
    %484 = vector.broadcast %86 : f32 to vector<2x128xf32>
    %485 = arith.mulf %149, %484 : vector<2x128xf32>
    %486 = arith.addf %480, %485 : vector<2x128xf32>
    %487 = vector.broadcast %87 : f32 to vector<2x128xf32>
    %488 = arith.mulf %155, %487 : vector<2x128xf32>
    %489 = arith.addf %483, %488 : vector<2x128xf32>
    %490 = vector.broadcast %88 : f32 to vector<2x128xf32>
    %491 = arith.mulf %161, %490 : vector<2x128xf32>
    %492 = arith.addf %486, %491 : vector<2x128xf32>
    %493 = vector.broadcast %89 : f32 to vector<2x128xf32>
    %494 = arith.mulf %167, %493 : vector<2x128xf32>
    %495 = arith.addf %489, %494 : vector<2x128xf32>
    %496 = arith.addf %492, %495 : vector<2x128xf32>
    %497 = arith.mulf %467, %496 : vector<2x128xf32>
    %498 = arith.addf %424, %497 : vector<2x128xf32>
    %cst_247 = arith.constant 2.24999976 : f32
    %499 = vector.broadcast %cst_247 : f32 to vector<2x128xf32>
    %500 = arith.subf %107, %499 : vector<2x128xf32>
    %501 = arith.mulf %500, %500 : vector<2x128xf32>
    %cst_248 = arith.constant 0.000000e+00 : f32
    %502 = vector.broadcast %cst_248 : f32 to vector<2x128xf32>
    %503 = arith.subf %502, %501 : vector<2x128xf32>
    %504 = math.exp %503 : vector<2x128xf32>
    %505 = vector.broadcast %90 : f32 to vector<2x128xf32>
    %506 = arith.mulf %113, %505 : vector<2x128xf32>
    %507 = vector.broadcast %91 : f32 to vector<2x128xf32>
    %508 = arith.mulf %119, %507 : vector<2x128xf32>
    %509 = vector.broadcast %92 : f32 to vector<2x128xf32>
    %510 = arith.mulf %125, %509 : vector<2x128xf32>
    %511 = arith.addf %506, %510 : vector<2x128xf32>
    %512 = vector.broadcast %93 : f32 to vector<2x128xf32>
    %513 = arith.mulf %131, %512 : vector<2x128xf32>
    %514 = arith.addf %508, %513 : vector<2x128xf32>
    %515 = vector.broadcast %94 : f32 to vector<2x128xf32>
    %516 = arith.mulf %137, %515 : vector<2x128xf32>
    %517 = arith.addf %511, %516 : vector<2x128xf32>
    %518 = vector.broadcast %95 : f32 to vector<2x128xf32>
    %519 = arith.mulf %143, %518 : vector<2x128xf32>
    %520 = arith.addf %514, %519 : vector<2x128xf32>
    %521 = vector.broadcast %96 : f32 to vector<2x128xf32>
    %522 = arith.mulf %149, %521 : vector<2x128xf32>
    %523 = arith.addf %517, %522 : vector<2x128xf32>
    %524 = vector.broadcast %97 : f32 to vector<2x128xf32>
    %525 = arith.mulf %155, %524 : vector<2x128xf32>
    %526 = arith.addf %520, %525 : vector<2x128xf32>
    %527 = vector.broadcast %98 : f32 to vector<2x128xf32>
    %528 = arith.mulf %161, %527 : vector<2x128xf32>
    %529 = arith.addf %523, %528 : vector<2x128xf32>
    %530 = vector.broadcast %99 : f32 to vector<2x128xf32>
    %531 = arith.mulf %167, %530 : vector<2x128xf32>
    %532 = arith.addf %526, %531 : vector<2x128xf32>
    %533 = arith.addf %529, %532 : vector<2x128xf32>
    %534 = arith.mulf %504, %533 : vector<2x128xf32>
    %535 = arith.addf %461, %534 : vector<2x128xf32>
    %536 = arith.addf %498, %535 : vector<2x128xf32>
    %c0_249 = arith.constant 0 : index
    %c0_250 = arith.constant 0 : index
    %c0_251 = arith.constant 0 : index
    %c0_252 = arith.constant 0 : index
    %537 = vector.load %arg6[%c0_249, %c0_250, %c0_251, %c0_252] : memref<1x1x2x128xf32, #tpu.memory_space<vmem>>, vector<1x1x2x128xf32>
    %538 = vector.shape_cast %537 : vector<1x1x2x128xf32> to vector<2x128xf32>
    %539 = vector.shape_cast %536 : vector<2x128xf32> to vector<1x1x2x128xf32>
    tpu.vector_store %arg6[%c0_249, %c0_250, %c0_251, %c0_252], %539 {strides = array<i32>} : memref<1x1x2x128xf32, #tpu.memory_space<vmem>>, vector<1x1x2x128xf32>,
    return
  }
  func.func @transform_0(%arg0: i32, %arg1: i32, %arg2: i32) -> (i32, i32, i32) {
    %c0_i32 = arith.constant 0 : i32
    %c0_i32_0 = arith.constant 0 : i32
    %c0_i32_1 = arith.constant 0 : i32
    return %arg1, %c0_i32, %c0_i32_0 : i32, i32, i32
  }
  func.func @transform_1(%arg0: i32, %arg1: i32, %arg2: i32) -> (i32, i32, i32, i32) {
    %c0_i32 = arith.constant 0 : i32
    %c0_i32_0 = arith.constant 0 : i32
    return %arg0, %arg1, %arg2, %c0_i32 : i32, i32, i32, i32
  }
  func.func @transform_2(%arg0: i32, %arg1: i32, %arg2: i32) -> (i32, i32, i32, i32) {
    %c2_i32 = arith.constant 2 : i32
    %0 = arith.addi %arg1, %c2_i32 : i32
    %c0_i32 = arith.constant 0 : i32
    %c0_i32_0 = arith.constant 0 : i32
    return %arg0, %0, %arg2, %c0_i32 : i32, i32, i32, i32
  }
  func.func @transform_3(%arg0: i32, %arg1: i32, %arg2: i32) -> (i32, i32, i32, i32) {
    %c0_i32 = arith.constant 0 : i32
    %c0_i32_0 = arith.constant 0 : i32
    return %arg0, %arg1, %arg2, %c0_i32 : i32, i32, i32, i32
  }
}

</mosaic_0001>

<llo_original>
// kernel: tpu_custom_call.1
$region0: #{tpu_custom_call.1}
  #allocation0 [shape = 'u32[]', space=smem, size = 0x4, offset = 0x4, fixed_abs, tag = 'smem constant byte address 0x4 - core index']
  #allocation1 [shape = 'u32[72,128]{1,0:T(1,128)}', space=vmem, size = 0x9000, scoped, tag = 'internal scratch']
  %s0 = inlined_call_operand.hbm [shape: f32[2,1,100], index: 0, kind: input, shape index: {}]
  %s1 = inlined_call_operand.hbm [shape: f32[2,4,2,128], index: 1, kind: input, shape index: {}]
  %s2 = inlined_call_operand.hbm [shape: f32[2,4,2,128], index: 2, kind: input, shape index: {}]
  %s3 = inlined_call_operand.hbm [shape: f32[2,2,2,128], index: 3, kind: output, shape index: {}]
  %s4 = sld [smem:[#allocation0]]
  $region57: #{tpu_custom_call.1} parent=0
    _
  %s6 = ssub.s32 1, %s4
  %s7 = scalar_select 0, %s6, %s4
  $region1: #{tpu_custom_call.1} parent=0
    #allocation2 [shape = 'u8[1024]{0}', space=smem, size = 0x400, scoped, tag = 'input window, operand 0']
    #allocation3 [shape = 's32[2]{0}', space=sflag, size = 0x8, scoped, tag = 'scoped memory for tpu_custom_call.1']
    #allocation4 [shape = 's32[2]{0}', space=sflag, size = 0x8, scoped, tag = 'scoped memory for tpu_custom_call.1']
    #allocation5 [shape = 's32[2]{0}', space=sflag, size = 0x8, scoped, tag = 'scoped memory for tpu_custom_call.1']
    #allocation6 [shape = 'u8[2048]{0}', space=vmem, size = 0x800, scoped, tag = 'input window, operand 1']
    #allocation7 [shape = 'u8[2048]{0}', space=vmem, size = 0x800, scoped, tag = 'input window, operand 2']
    #allocation8 [shape = 's32[2]{0}', space=sflag, size = 0x8, scoped, tag = 'scoped memory for tpu_custom_call.1']
    #allocation9 [shape = 'u8[2048]{0}', space=vmem, size = 0x800, scoped, tag = 'output window, operand 0']
    %8 = vsyncpa [#allocation5], 0
    %s9 = scalar_lea.sflag [#allocation5], 1
    %10 = vsyncpa %s9, 0
    %11 = vsyncpa [#allocation3], 0
    %s12 = scalar_lea.sflag [#allocation3], 1
    %13 = vsyncpa %s12, 0
    %14 = vsyncpa [#allocation8], 0
    %s15 = scalar_lea.sflag [#allocation8], 1
    %16 = vsyncpa %s15, 0
    %17 = vsyncpa [#allocation4], 0
    %s18 = scalar_lea.sflag [#allocation4], 1
    %19 = vsyncpa %s18, 0
    loop: start=0, step=1, limit=6
    $region2: #{tpu_custom_call.1} parent=1 // loop_pre_header
      _
    $region3: #{tpu_custom_call.1} parent=1 // loop_header
      %s21 = sphi 0, %s25
      %p22 = scmp.ge.s32.totalorder %s21, 6
      %s28 = sphi 0, %s47
      %s29 = sphi 0, %s43
      %s30 = sphi 0, %s39
      %s31 = sphi 0, %s28
      %s32 = sphi 0, %s29
      %s33 = sphi 0, %s30
      %s34 = sphi 0, %s31
      %s35 = sphi 0, %s32
      %s36 = sphi 0, %s33
      %s50 = sphi 0, %s52
      %s53 = sphi 0, %s50
      %s54 = sphi 0, %s53
      %s70 = sphi 0, %s54
      %s80 = sphi 0, %s82
      %s83 = sphi 0, %s80
      %s84 = sphi 0, %s83
      %s100 = sphi 0, %s84
      %s112 = sphi 0, %s114
      %s115 = sphi 0, %s112
      %s116 = sphi 0, %s115
      %s132 = sphi 0, %s116
      %s142 = sphi 0, %s144
      %s145 = sphi 0, %s142
      %s146 = sphi 0, %s145
      %s162 = sphi 0, %s146
    $region4: #{tpu_custom_call.1} parent=1 // loop_header_branch
      %24 = sbr.rel (%p22) target = $region8
    $region5: #{tpu_custom_call.1} parent=1 // loop_body
      %s26 = ssub.s32 %s21, 1
      %s27 = ssub.s32 %s21, 2
      %s37 = sadd.s32 1, %s30
      %p38 = scmp.ge.s32.totalorder %s37, 1
      %s39 = scalar_select %p38, 0, %s37
      %s40 = sadd.s32 1, %s29
      %s41 = scalar_select %p38, %s40, %s29
      %p42 = scmp.ge.s32.totalorder %s41, 2
      %s43 = scalar_select %p42, 0, %s41
      %s44 = sadd.s32 1, %s28
      %s45 = scalar_select %p42, %s44, %s28
      %p46 = scmp.ge.s32.totalorder %s45, 2
      %s47 = scalar_select %p46, 0, %s45
      %s48 = ssub.s32 %s29, %s43
      %p49 = scmp.eq.s32.totalorder %s48, 0
      %s51 = sadd.s32 %s50, 1
      %s52 = scalar_select %p49, %s50, %s51
      %p55 = pneg %p49
      %p56 = scmp.eq.s32.totalorder %s21, 3
      %p57 = por %p55, %p56
      %p58 = scmp.ne.s32.totalorder %s50, %s53
      %p59 = scmp.eq.s32.totalorder %s21, 0
      %p60 = por %p58, %p59
      %p61 = scmp.ne.s32.totalorder %s50, %s53
      %p62 = scmp.eq.s32.totalorder %s26, 3
      %p63 = por %p61, %p62
      %p64 = scmp.ne.s32.totalorder %s53, %s54
      %p65 = scmp.eq.s32.totalorder %s26, 0
      %p66 = por %p64, %p65
      %p67 = scmp.ne.s32.totalorder %s53, %s54
      %p68 = scmp.eq.s32.totalorder %s27, 3
      %p69 = por %p67, %p68
      %p71 = scmp.ne.s32.totalorder %s54, %s70
      %p72 = scmp.eq.s32.totalorder %s27, 0
      %p73 = por %p71, %p72
      %s74 = ssub.s32 %s28, %s47
      %s75 = ssub.s32 %s29, %s43
      %s76 = sor.u32 %s74, %s75
      %s77 = ssub.s32 %s30, %s39
      %s78 = sor.u32 %s76, %s77
      %p79 = scmp.eq.s32.totalorder %s78, 0
      %s81 = sadd.s32 %s80, 1
      %s82 = scalar_select %p79, %s80, %s81
      %p85 = pneg %p79
      %p86 = scmp.eq.s32.totalorder %s21, 3
      %p87 = por %p85, %p86
      %p88 = scmp.ne.s32.totalorder %s80, %s83
      %p89 = scmp.eq.s32.totalorder %s21, 0
      %p90 = por %p88, %p89
      %p91 = scmp.ne.s32.totalorder %s80, %s83
      %p92 = scmp.eq.s32.totalorder %s26, 3
      %p93 = por %p91, %p92
      %p94 = scmp.ne.s32.totalorder %s83, %s84
      %p95 = scmp.eq.s32.totalorder %s26, 0
      %p96 = por %p94, %p95
      %p97 = scmp.ne.s32.totalorder %s83, %s84
      %p98 = scmp.eq.s32.totalorder %s27, 3
      %p99 = por %p97, %p98
      %p101 = scmp.ne.s32.totalorder %s84, %s100
      %p102 = scmp.eq.s32.totalorder %s27, 0
      %p103 = por %p101, %p102
      %s104 = sadd.s32 %s29, 2
      %s105 = sadd.s32 %s43, 2
      %s106 = ssub.s32 %s28, %s47
      %s107 = ssub.s32 %s104, %s105
      %s108 = sor.u32 %s106, %s107
      %s109 = ssub.s32 %s30, %s39
      %s110 = sor.u32 %s108, %s109
      %p111 = scmp.eq.s32.totalorder %s110, 0
      %s113 = sadd.s32 %s112, 1
      %s114 = scalar_select %p111, %s112, %s113
      %p117 = pneg %p111
      %p118 = scmp.eq.s32.totalorder %s21, 3
      %p119 = por %p117, %p118
      %p120 = scmp.ne.s32.totalorder %s112, %s115
      %p121 = scmp.eq.s32.totalorder %s21, 0
      %p122 = por %p120, %p121
      %p123 = scmp.ne.s32.totalorder %s112, %s115
      %p124 = scmp.eq.s32.totalorder %s26, 3
      %p125 = por %p123, %p124
      %p126 = scmp.ne.s32.totalorder %s115, %s116
      %p127 = scmp.eq.s32.totalorder %s26, 0
      %p128 = por %p126, %p127
      %p129 = scmp.ne.s32.totalorder %s115, %s116
      %p130 = scmp.eq.s32.totalorder %s27, 3
      %p131 = por %p129, %p130
      %p133 = scmp.ne.s32.totalorder %s116, %s132
      %p134 = scmp.eq.s32.totalorder %s27, 0
      %p135 = por %p133, %p134
      %s136 = ssub.s32 %s28, %s47
      %s137 = ssub.s32 %s29, %s43
      %s138 = sor.u32 %s136, %s137
      %s139 = ssub.s32 %s30, %s39
      %s140 = sor.u32 %s138, %s139
      %p141 = scmp.eq.s32.totalorder %s140, 0
      %s143 = sadd.s32 %s142, 1
      %s144 = scalar_select %p141, %s142, %s143
      %p147 = pneg %p141
      %p148 = scmp.eq.s32.totalorder %s21, 3
      %p149 = por %p147, %p148
      %p150 = scmp.ne.s32.totalorder %s142, %s145
      %p151 = scmp.eq.s32.totalorder %s21, 0
      %p152 = por %p150, %p151
      %p153 = scmp.ne.s32.totalorder %s142, %s145
      %p154 = scmp.eq.s32.totalorder %s26, 3
      %p155 = por %p153, %p154
      %p156 = scmp.ne.s32.totalorder %s145, %s146
      %p157 = scmp.eq.s32.totalorder %s26, 0
      %p158 = por %p156, %p157
      %p159 = scmp.ne.s32.totalorder %s145, %s146
      %p160 = scmp.eq.s32.totalorder %s27, 3
      %p161 = por %p159, %p160
      %p163 = scmp.ne.s32.totalorder %s146, %s162
      %p164 = scmp.eq.s32.totalorder %s27, 0
      %p165 = por %p163, %p164
      %p166 = scmp.le.s32.totalorder 1, %s21
      %p167 = scmp.lt.s32.totalorder %s21, 5
      %p168 = pnand %p166, %p167
      %p169 = pneg %p168
      // Predicated region
      $region9: #{tpu_custom_call.1} parent=5 // pred_check
        _
      $region10: #{tpu_custom_call.1} parent=5 // pred_check_branch
        %171 = sbr.rel (%p168) target = $region12
      $region11: #{tpu_custom_call.1} parent=5 // pred_region
        %s172 = ssub.s32 %s21, 1
      $region12: #{tpu_custom_call.1} parent=5 // pred_fallthru
        _
      %p173 = scmp.lt.s32.totalorder %s21, 4
      // Predicated region
      $region13: #{tpu_custom_call.1} parent=5 // pred_check
        %p174 = pneg %p173
      $region14: #{tpu_custom_call.1} parent=5 // pred_check_branch
        %176 = sbr.rel (%p174) target = $region16
      $region15: #{tpu_custom_call.1} parent=5 // pred_region
        // Predicated region
        $region17: #{tpu_custom_call.1} parent=15 // pred_check
          %p177 = pneg %p60
        $region18: #{tpu_custom_call.1} parent=15 // pred_check_branch
          %179 = sbr.rel (%p177) target = $region20
        $region19: #{tpu_custom_call.1} parent=15 // pred_region
          %s180 = sand.u32 %s50, 1
          %s181 = scalar_lea.sflag [#allocation5], %s180
          %s182 = sand.u32 %s50, 1
          %s183 = smul.addr %s182, 128
          %s184 = scalar_lea.smem [#allocation2], %s183
          %186 = vsyncadd %s181, 0
          %s187 = scalar_lea.hbm %s0, %s29
          %s189 = sshll.u32 %s187, 4
          %s190 = int_to_ptr.hbm [resolvable:$true] %s189
          %192 = dma.hbm_to_smem %s190, 16, %s184, %s181
        $region20: #{tpu_custom_call.1} parent=15 // pred_fallthru
          _
        // Predicated region
        $region21: #{tpu_custom_call.1} parent=15 // pred_check
          %p193 = pneg %p90
        $region22: #{tpu_custom_call.1} parent=15 // pred_check_branch
          %195 = sbr.rel (%p193) target = $region24
        $region23: #{tpu_custom_call.1} parent=15 // pred_region
          %s196 = sand.u32 %s80, 1
          %s197 = scalar_lea.sflag [#allocation3], %s196
          %s198 = sand.u32 %s80, 1
          %s199 = smul.addr %s198, 2
          %s200 = scalar_lea.vmem [#allocation6], %s199
          %202 = vsyncadd %s197, 0
          %s203 = sadd.s32 %s30, %s29
          %s204 = smul.addr %s28, 4
          %s205 = sadd.s32 %s203, %s204
          %s206 = smul.addr %s205, 2
          %s207 = scalar_lea.hbm %s1, %s206
          %s209 = sshll.u32 %s207, 4
          %s210 = int_to_ptr.hbm [resolvable:$true] %s209
          %s211 = sshll.u32 %s200, 4
          %s212 = int_to_ptr.vmem [resolvable:$true] %s211
          %214 = dma.hbm_to_vmem [thread:$0]  %s210, 32, %s212, %s197
        $region24: #{tpu_custom_call.1} parent=15 // pred_fallthru
          _
        // Predicated region
        $region25: #{tpu_custom_call.1} parent=15 // pred_check
          %p215 = pneg %p122
        $region26: #{tpu_custom_call.1} parent=15 // pred_check_branch
          %217 = sbr.rel (%p215) target = $region28
        $region27: #{tpu_custom_call.1} parent=15 // pred_region
          %s218 = sand.u32 %s112, 1
          %s219 = scalar_lea.sflag [#allocation8], %s218
          %s220 = sand.u32 %s112, 1
          %s221 = smul.addr %s220, 2
          %s222 = scalar_lea.vmem [#allocation7], %s221
          %s223 = sadd.s32 %s29, 2
          %225 = vsyncadd %s219, 0
          %s226 = sadd.s32 %s30, %s223
          %s227 = smul.addr %s28, 4
          %s228 = sadd.s32 %s226, %s227
          %s229 = smul.addr %s228, 2
          %s230 = scalar_lea.hbm %s2, %s229
          %s232 = sshll.u32 %s230, 4
          %s233 = int_to_ptr.hbm [resolvable:$true] %s232
          %s234 = sshll.u32 %s222, 4
          %s235 = int_to_ptr.vmem [resolvable:$true] %s234
          %237 = dma.hbm_to_vmem [thread:$0]  %s233, 32, %s235, %s219
        $region28: #{tpu_custom_call.1} parent=15 // pred_fallthru
          _
      $region16: #{tpu_custom_call.1} parent=5 // pred_fallthru
        _
      %p238 = scmp.le.s32.totalorder 1, %s21
      %p239 = scmp.lt.s32.totalorder %s21, 5
      %p240 = pnand %p238, %p239
      %p241 = pneg %p240
      // Predicated region
      $region29: #{tpu_custom_call.1} parent=5 // pred_check
        _
      $region30: #{tpu_custom_call.1} parent=5 // pred_check_branch
        %243 = sbr.rel (%p240) target = $region32
      $region31: #{tpu_custom_call.1} parent=5 // pred_region
        %s244 = ssub.s32 %s21, 1
        %s245 = sand.u32 %s53, 1
        %s246 = scalar_lea.sflag [#allocation5], %s245
        %s247 = sand.u32 %s53, 1
        %s248 = smul.addr %s247, 128
        %s249 = scalar_lea.smem [#allocation2], %s248
        // Predicated region
        $region33: #{tpu_custom_call.1} parent=31 // pred_check
          %p250 = pneg %p66
        $region34: #{tpu_custom_call.1} parent=31 // pred_check_branch
          %252 = sbr.rel (%p250) target = $region36
        $region35: #{tpu_custom_call.1} parent=31 // pred_region
          %254 = dma.done %s246, 16
        $region36: #{tpu_custom_call.1} parent=31 // pred_fallthru
          _
        %s255 = sand.u32 %s83, 1
        %s256 = scalar_lea.sflag [#allocation3], %s255
        %s257 = sand.u32 %s83, 1
        %s258 = smul.addr %s257, 2
        %s259 = scalar_lea.vmem [#allocation6], %s258
        // Predicated region
        $region37: #{tpu_custom_call.1} parent=31 // pred_check
          %p260 = pneg %p96
        $region38: #{tpu_custom_call.1} parent=31 // pred_check_branch
          %262 = sbr.rel (%p260) target = $region40
        $region39: #{tpu_custom_call.1} parent=31 // pred_region
          %264 = dma.done %s256, 32
        $region40: #{tpu_custom_call.1} parent=31 // pred_fallthru
          _
        %s265 = sand.u32 %s115, 1
        %s266 = scalar_lea.sflag [#allocation8], %s265
        %s267 = sand.u32 %s115, 1
        %s268 = smul.addr %s267, 2
        %s269 = scalar_lea.vmem [#allocation7], %s268
        // Predicated region
        $region41: #{tpu_custom_call.1} parent=31 // pred_check
          %p270 = pneg %p128
        $region42: #{tpu_custom_call.1} parent=31 // pred_check_branch
          %272 = sbr.rel (%p270) target = $region44
        $region43: #{tpu_custom_call.1} parent=31 // pred_region
          %274 = dma.done %s266, 32
        $region44: #{tpu_custom_call.1} parent=31 // pred_fallthru
          _
        %275 = sfence
        %s276 = sand.u32 %s53, 1
        %s277 = scalar_lea.sflag [#allocation5], %s276
        %s278 = sand.u32 %s53, 1
        %s279 = smul.addr %s278, 128
        %s280 = scalar_lea.smem [#allocation2], %s279
        %p281 = pneg %p66
        %p282 = pneg %p63
        %s283 = sand.u32 %s83, 1
        %s284 = scalar_lea.sflag [#allocation3], %s283
        %s285 = sand.u32 %s83, 1
        %s286 = smul.addr %s285, 2
        %s287 = scalar_lea.vmem [#allocation6], %s286
        %p288 = pneg %p96
        %p289 = pneg %p93
        %s290 = sand.u32 %s115, 1
        %s291 = scalar_lea.sflag [#allocation8], %s290
        %s292 = sand.u32 %s115, 1
        %s293 = smul.addr %s292, 2
        %s294 = scalar_lea.vmem [#allocation7], %s293
        %p295 = pneg %p128
        %p296 = pneg %p125
        %p297 = pneg %p158
        %p298 = pneg %p155
        %s299 = sand.u32 %s145, 1
        %s300 = scalar_lea.sflag [#allocation4], %s299
        %s301 = sand.u32 %s145, 1
        %s302 = smul.addr %s301, 2
        %s303 = scalar_lea.vmem [#allocation9], %s302
        %s304 = sadd.s32 %s32, 2
        %s305 = sld [smem:[%s249]]
        %s306 = sld [smem:[%s249 + $0x1]]
        %s307 = sld [smem:[%s249 + $0x2]]
        %s308 = sld [smem:[%s249 + $0x3]]
        %s309 = sld [smem:[%s249 + $0x4]]
        %s310 = sld [smem:[%s249 + $0x5]]
        %s311 = sld [smem:[%s249 + $0x6]]
        %s312 = sld [smem:[%s249 + $0x7]]
        %s313 = sld [smem:[%s249 + $0x8]]
        %s314 = sld [smem:[%s249 + $0x9]]
        %s315 = sld [smem:[%s249 + $0xa]]
        %s316 = sld [smem:[%s249 + $0xb]]
        %s317 = sld [smem:[%s249 + $0xc]]
        %s318 = sld [smem:[%s249 + $0xd]]
        %s319 = sld [smem:[%s249 + $0xe]]
        %s320 = sld [smem:[%s249 + $0xf]]
        %s321 = sld [smem:[%s249 + $0x10]]
        %s322 = sld [smem:[%s249 + $0x11]]
        %s323 = sld [smem:[%s249 + $0x12]]
        %s324 = sld [smem:[%s249 + $0x13]]
        %s325 = sld [smem:[%s249 + $0x14]]
        %s326 = sld [smem:[%s249 + $0x15]]
        %s327 = sld [smem:[%s249 + $0x16]]
        %s328 = sld [smem:[%s249 + $0x17]]
        %s329 = sld [smem:[%s249 + $0x18]]
        %s330 = sld [smem:[%s249 + $0x19]]
        %s331 = sld [smem:[%s249 + $0x1a]]
        %s332 = sld [smem:[%s249 + $0x1b]]
        %s333 = sld [smem:[%s249 + $0x1c]]
        %s334 = sld [smem:[%s249 + $0x1d]]
        %s335 = sld [smem:[%s249 + $0x1e]]
        %s336 = sld [smem:[%s249 + $0x1f]]
        %s337 = sld [smem:[%s249 + $0x20]]
        %s338 = sld [smem:[%s249 + $0x21]]
        %s339 = sld [smem:[%s249 + $0x22]]
        %s340 = sld [smem:[%s249 + $0x23]]
        %s341 = sld [smem:[%s249 + $0x24]]
        %s342 = sld [smem:[%s249 + $0x25]]
        %s343 = sld [smem:[%s249 + $0x26]]
        %s344 = sld [smem:[%s249 + $0x27]]
        %s345 = sld [smem:[%s249 + $0x28]]
        %s346 = sld [smem:[%s249 + $0x29]]
        %s347 = sld [smem:[%s249 + $0x2a]]
        %s348 = sld [smem:[%s249 + $0x2b]]
        %s349 = sld [smem:[%s249 + $0x2c]]
        %s350 = sld [smem:[%s249 + $0x2d]]
        %s351 = sld [smem:[%s249 + $0x2e]]
        %s352 = sld [smem:[%s249 + $0x2f]]
        %s353 = sld [smem:[%s249 + $0x30]]
        %s354 = sld [smem:[%s249 + $0x31]]
        %s355 = sld [smem:[%s249 + $0x32]]
        %s356 = sld [smem:[%s249 + $0x33]]
        %s357 = sld [smem:[%s249 + $0x34]]
        %s358 = sld [smem:[%s249 + $0x35]]
        %s359 = sld [smem:[%s249 + $0x36]]
        %s360 = sld [smem:[%s249 + $0x37]]
        %s361 = sld [smem:[%s249 + $0x38]]
        %s362 = sld [smem:[%s249 + $0x39]]
        %s363 = sld [smem:[%s249 + $0x3a]]
        %s364 = sld [smem:[%s249 + $0x3b]]
        %s365 = sld [smem:[%s249 + $0x3c]]
        %s366 = sld [smem:[%s249 + $0x3d]]
        %s367 = sld [smem:[%s249 + $0x3e]]
        %s368 = sld [smem:[%s249 + $0x3f]]
        %s369 = sld [smem:[%s249 + $0x40]]
        %s370 = sld [smem:[%s249 + $0x41]]
        %s371 = sld [smem:[%s249 + $0x42]]
        %s372 = sld [smem:[%s249 + $0x43]]
        %s373 = sld [smem:[%s249 + $0x44]]
        %s374 = sld [smem:[%s249 + $0x45]]
        %s375 = sld [smem:[%s249 + $0x46]]
        %s376 = sld [smem:[%s249 + $0x47]]
        %s377 = sld [smem:[%s249 + $0x48]]
        %s378 = sld [smem:[%s249 + $0x49]]
        %s379 = sld [smem:[%s249 + $0x4a]]
        %s380 = sld [smem:[%s249 + $0x4b]]
        %s381 = sld [smem:[%s249 + $0x4c]]
        %s382 = sld [smem:[%s249 + $0x4d]]
        %s383 = sld [smem:[%s249 + $0x4e]]
        %s384 = sld [smem:[%s249 + $0x4f]]
        %s385 = sld [smem:[%s249 + $0x50]]
        %s386 = sld [smem:[%s249 + $0x51]]
        %s387 = sld [smem:[%s249 + $0x52]]
        %s388 = sld [smem:[%s249 + $0x53]]
        %s389 = sld [smem:[%s249 + $0x54]]
        %s390 = sld [smem:[%s249 + $0x55]]
        %s391 = sld [smem:[%s249 + $0x56]]
        %s392 = sld [smem:[%s249 + $0x57]]
        %s393 = sld [smem:[%s249 + $0x58]]
        %s394 = sld [smem:[%s249 + $0x59]]
        %s395 = sld [smem:[%s249 + $0x5a]]
        %s396 = sld [smem:[%s249 + $0x5b]]
        %s397 = sld [smem:[%s249 + $0x5c]]
        %s398 = sld [smem:[%s249 + $0x5d]]
        %s399 = sld [smem:[%s249 + $0x5e]]
        %s400 = sld [smem:[%s249 + $0x5f]]
        %s401 = sld [smem:[%s249 + $0x60]]
        %s402 = sld [smem:[%s249 + $0x61]]
        %s403 = sld [smem:[%s249 + $0x62]]
        %s404 = sld [smem:[%s249 + $0x63]]
        %v405 = vld [vmem:[%s259] sm:$0x3]
        %v406 = vmul.f32 %v405, 0.74999994
        %v407 = vld [vmem:[%s269] sm:$0x3]
        %v408 = vmul.f32 %v407, 0.74999994
        %v409 = vsub.f32 %v406, -2.2499998
        %v410 = vmul.f32 %v409, %v409
        %v411 = vsub.f32 0.0, %v410
        %v412 = vmul.f32 %v411, 1.442695
        %v413 = vpow.pop %v412
        %v414 = vsub.f32 %v406, -1.7499998
        %v415 = vmul.f32 %v414, %v414
        %v416 = vsub.f32 0.0, %v415
        %v417 = vmul.f32 %v416, 1.442695
        %v418 = vpow.pop %v417
        %v419 = vsub.f32 %v406, -1.2499999
        %v420 = vmul.f32 %v419, %v419
        %v421 = vsub.f32 0.0, %v420
        %v422 = vmul.f32 %v421, 1.442695
        %v423 = vpow.pop %v422
        %v424 = vsub.f32 %v406, -0.74999994
        %v425 = vmul.f32 %v424, %v424
        %v426 = vsub.f32 0.0, %v425
        %v427 = vmul.f32 %v426, 1.442695
        %v428 = vpow.pop %v427
        %v429 = vsub.f32 %v406, -0.24999999
        %v430 = vmul.f32 %v429, %v429
        %v431 = vsub.f32 0.0, %v430
        %v432 = vmul.f32 %v431, 1.442695
        %v433 = vpow.pop %v432
        %v434 = vsub.f32 %v406, 0.24999999
        %v435 = vmul.f32 %v434, %v434
        %v436 = vsub.f32 0.0, %v435
        %v437 = vmul.f32 %v436, 1.442695
        %v438 = vpow.pop %v437
        %v439 = vsub.f32 %v406, 0.74999994
        %v440 = vmul.f32 %v439, %v439
        %v441 = vsub.f32 0.0, %v440
        %v442 = vmul.f32 %v441, 1.442695
        %v443 = vpow.pop %v442
        %v444 = vsub.f32 %v406, 1.2499999
        %v445 = vmul.f32 %v444, %v444
        %v446 = vsub.f32 0.0, %v445
        %v447 = vmul.f32 %v446, 1.442695
        %v448 = vpow.pop %v447
        %v449 = vsub.f32 %v406, 1.7499998
        %v450 = vmul.f32 %v449, %v449
        %v451 = vsub.f32 0.0, %v450
        %v452 = vmul.f32 %v451, 1.442695
        %v453 = vpow.pop %v452
        %v454 = vsub.f32 %v406, 2.2499998
        %v455 = vmul.f32 %v454, %v454
        %v456 = vsub.f32 0.0, %v455
        %v457 = vmul.f32 %v456, 1.442695
        %v458 = vpow.pop %v457
        %v459 = vsub.f32 %v408, -2.2499998
        %v460 = vmul.f32 %v459, %v459
        %v461 = vsub.f32 0.0, %v460
        %v462 = vmul.f32 %v461, 1.442695
        %v463 = vpow.pop %v462
        %v464 = vstv %s305
        %v465 = vmul.f32 %v413, %v464
        %v466 = vstv %s306
        %v467 = vmul.f32 %v418, %v466
        %v468 = vstv %s307
        %v469 = vmul.f32 %v423, %v468
        %v470 = vadd.f32 %v465, %v469
        %v471 = vstv %s308
        %v472 = vmul.f32 %v428, %v471
        %v473 = vadd.f32 %v467, %v472
        %v474 = vstv %s309
        %v475 = vmul.f32 %v433, %v474
        %v476 = vadd.f32 %v470, %v475
        %v477 = vstv %s310
        %v478 = vmul.f32 %v438, %v477
        %v479 = vadd.f32 %v473, %v478
        %v480 = vstv %s311
        %v481 = vmul.f32 %v443, %v480
        %v482 = vadd.f32 %v476, %v481
        %v483 = vstv %s312
        %v484 = vmul.f32 %v448, %v483
        %v485 = vadd.f32 %v479, %v484
        %v486 = vstv %s313
        %v487 = vmul.f32 %v453, %v486
        %v488 = vadd.f32 %v482, %v487
        %v489 = vstv %s314
        %v490 = vmul.f32 %v458, %v489
        %v491 = vadd.f32 %v485, %v490
        %v492 = vadd.f32 %v488, %v491
        %v493 = vmul.f32 %v463, %v492
        %v494 = vsub.f32 %v408, -1.7499998
        %v495 = vmul.f32 %v494, %v494
        %v496 = vsub.f32 0.0, %v495
        %v497 = vmul.f32 %v496, 1.442695
        %v498 = vpow.pop %v497
        %v499 = vstv %s315
        %v500 = vmul.f32 %v413, %v499
        %v501 = vstv %s316
        %v502 = vmul.f32 %v418, %v501
        %v503 = vstv %s317
        %v504 = vmul.f32 %v423, %v503
        %v505 = vadd.f32 %v500, %v504
        %v506 = vstv %s318
        %v507 = vmul.f32 %v428, %v506
        %v508 = vadd.f32 %v502, %v507
        %v509 = vstv %s319
        %v510 = vmul.f32 %v433, %v509
        %v511 = vadd.f32 %v505, %v510
        %v512 = vstv %s320
        %v513 = vmul.f32 %v438, %v512
        %v514 = vadd.f32 %v508, %v513
        %v515 = vstv %s321
        %v516 = vmul.f32 %v443, %v515
        %v517 = vadd.f32 %v511, %v516
        %v518 = vstv %s322
        %v519 = vmul.f32 %v448, %v518
        %v520 = vadd.f32 %v514, %v519
        %v521 = vstv %s323
        %v522 = vmul.f32 %v453, %v521
        %v523 = vadd.f32 %v517, %v522
        %v524 = vstv %s324
        %v525 = vmul.f32 %v458, %v524
        %v526 = vadd.f32 %v520, %v525
        %v527 = vadd.f32 %v523, %v526
        %v528 = vmul.f32 %v498, %v527
        %v529 = vsub.f32 %v408, -1.2499999
        %v530 = vmul.f32 %v529, %v529
        %v531 = vsub.f32 0.0, %v530
        %v532 = vmul.f32 %v531, 1.442695
        %v533 = vpow.pop %v532
        %v534 = vstv %s325
        %v535 = vmul.f32 %v413, %v534
        %v536 = vstv %s326
        %v537 = vmul.f32 %v418, %v536
        %v538 = vstv %s327
        %v539 = vmul.f32 %v423, %v538
        %v540 = vadd.f32 %v535, %v539
        %v541 = vstv %s328
        %v542 = vmul.f32 %v428, %v541
        %v543 = vadd.f32 %v537, %v542
        %v544 = vstv %s329
        %v545 = vmul.f32 %v433, %v544
        %v546 = vadd.f32 %v540, %v545
        %v547 = vstv %s330
        %v548 = vmul.f32 %v438, %v547
        %v549 = vadd.f32 %v543, %v548
        %v550 = vstv %s331
        %v551 = vmul.f32 %v443, %v550
        %v552 = vadd.f32 %v546, %v551
        %v553 = vstv %s332
        %v554 = vmul.f32 %v448, %v553
        %v555 = vadd.f32 %v549, %v554
        %v556 = vstv %s333
        %v557 = vmul.f32 %v453, %v556
        %v558 = vadd.f32 %v552, %v557
        %v559 = vstv %s334
        %v560 = vmul.f32 %v458, %v559
        %v561 = vadd.f32 %v555, %v560
        %v562 = vadd.f32 %v558, %v561
        %v563 = vmul.f32 %v533, %v562
        %v564 = vadd.f32 %v493, %v563
        %v565 = vsub.f32 %v408, -0.74999994
        %v566 = vmul.f32 %v565, %v565
        %v567 = vsub.f32 0.0, %v566
        %v568 = vmul.f32 %v567, 1.442695
        %v569 = vpow.pop %v568
        %v570 = vstv %s335
        %v571 = vmul.f32 %v413, %v570
        %v572 = vstv %s336
        %v573 = vmul.f32 %v418, %v572
        %v574 = vstv %s337
        %v575 = vmul.f32 %v423, %v574
        %v576 = vadd.f32 %v571, %v575
        %v577 = vstv %s338
        %v578 = vmul.f32 %v428, %v577
        %v579 = vadd.f32 %v573, %v578
        %v580 = vstv %s339
        %v581 = vmul.f32 %v433, %v580
        %v582 = vadd.f32 %v576, %v581
        %v583 = vstv %s340
        %v584 = vmul.f32 %v438, %v583
        %v585 = vadd.f32 %v579, %v584
        %v586 = vstv %s341
        %v587 = vmul.f32 %v443, %v586
        %v588 = vadd.f32 %v582, %v587
        %v589 = vstv %s342
        %v590 = vmul.f32 %v448, %v589
        %v591 = vadd.f32 %v585, %v590
        %v592 = vstv %s343
        %v593 = vmul.f32 %v453, %v592
        %v594 = vadd.f32 %v588, %v593
        %v595 = vstv %s344
        %v596 = vmul.f32 %v458, %v595
        %v597 = vadd.f32 %v591, %v596
        %v598 = vadd.f32 %v594, %v597
        %v599 = vmul.f32 %v569, %v598
        %v600 = vadd.f32 %v528, %v599
        %v601 = vsub.f32 %v408, -0.24999999
        %v602 = vmul.f32 %v601, %v601
        %v603 = vsub.f32 0.0, %v602
        %v604 = vmul.f32 %v603, 1.442695
        %v605 = vpow.pop %v604
        %v606 = vstv %s345
        %v607 = vmul.f32 %v413, %v606
        %v608 = vstv %s346
        %v609 = vmul.f32 %v418, %v608
        %v610 = vstv %s347
        %v611 = vmul.f32 %v423, %v610
        %v612 = vadd.f32 %v607, %v611
        %v613 = vstv %s348
        %v614 = vmul.f32 %v428, %v613
        %v615 = vadd.f32 %v609, %v614
        %v616 = vstv %s349
        %v617 = vmul.f32 %v433, %v616
        %v618 = vadd.f32 %v612, %v617
        %v619 = vstv %s350
        %v620 = vmul.f32 %v438, %v619
        %v621 = vadd.f32 %v615, %v620
        %v622 = vstv %s351
        %v623 = vmul.f32 %v443, %v622
        %v624 = vadd.f32 %v618, %v623
        %v625 = vstv %s352
        %v626 = vmul.f32 %v448, %v625
        %v627 = vadd.f32 %v621, %v626
        %v628 = vstv %s353
        %v629 = vmul.f32 %v453, %v628
        %v630 = vadd.f32 %v624, %v629
        %v631 = vstv %s354
        %v632 = vmul.f32 %v458, %v631
        %v633 = vadd.f32 %v627, %v632
        %v634 = vadd.f32 %v630, %v633
        %v635 = vmul.f32 %v605, %v634
        %v636 = vadd.f32 %v564, %v635
        %v637 = vsub.f32 %v408, 0.24999999
        %v638 = vmul.f32 %v637, %v637
        %v639 = vsub.f32 0.0, %v638
        %v640 = vmul.f32 %v639, 1.442695
        %v641 = vpow.pop %v640
        %v642 = vstv %s355
        %v643 = vmul.f32 %v413, %v642
        %v644 = vstv %s356
        %v645 = vmul.f32 %v418, %v644
        %v646 = vstv %s357
        %v647 = vmul.f32 %v423, %v646
        %v648 = vadd.f32 %v643, %v647
        %v649 = vstv %s358
        %v650 = vmul.f32 %v428, %v649
        %v651 = vadd.f32 %v645, %v650
        %v652 = vstv %s359
        %v653 = vmul.f32 %v433, %v652
        %v654 = vadd.f32 %v648, %v653
        %v655 = vstv %s360
        %v656 = vmul.f32 %v438, %v655
        %v657 = vadd.f32 %v651, %v656
        %v658 = vstv %s361
        %v659 = vmul.f32 %v443, %v658
        %v660 = vadd.f32 %v654, %v659
        %v661 = vstv %s362
        %v662 = vmul.f32 %v448, %v661
        %v663 = vadd.f32 %v657, %v662
        %v664 = vstv %s363
        %v665 = vmul.f32 %v453, %v664
        %v666 = vadd.f32 %v660, %v665
        %v667 = vstv %s364
        %v668 = vmul.f32 %v458, %v667
        %v669 = vadd.f32 %v663, %v668
        %v670 = vadd.f32 %v666, %v669
        %v671 = vmul.f32 %v641, %v670
        %v672 = vadd.f32 %v600, %v671
        %v673 = vsub.f32 %v408, 0.74999994
        %v674 = vmul.f32 %v673, %v673
        %v675 = vsub.f32 0.0, %v674
        %v676 = vmul.f32 %v675, 1.442695
        %v677 = vpow.pop %v676
        %v678 = vstv %s365
        %v679 = vmul.f32 %v413, %v678
        %v680 = vstv %s366
        %v681 = vmul.f32 %v418, %v680
        %v682 = vstv %s367
        %v683 = vmul.f32 %v423, %v682
        %v684 = vadd.f32 %v679, %v683
        %v685 = vstv %s368
        %v686 = vmul.f32 %v428, %v685
        %v687 = vadd.f32 %v681, %v686
        %v688 = vstv %s369
        %v689 = vmul.f32 %v433, %v688
        %v690 = vadd.f32 %v684, %v689
        %v691 = vstv %s370
        %v692 = vmul.f32 %v438, %v691
        %v693 = vadd.f32 %v687, %v692
        %v694 = vstv %s371
        %v695 = vmul.f32 %v443, %v694
        %v696 = vadd.f32 %v690, %v695
        %v697 = vstv %s372
        %v698 = vmul.f32 %v448, %v697
        %v699 = vadd.f32 %v693, %v698
        %v700 = vstv %s373
        %v701 = vmul.f32 %v453, %v700
        %v702 = vadd.f32 %v696, %v701
        %v703 = vstv %s374
        %v704 = vmul.f32 %v458, %v703
        %v705 = vadd.f32 %v699, %v704
        %v706 = vadd.f32 %v702, %v705
        %v707 = vmul.f32 %v677, %v706
        %v708 = vadd.f32 %v636, %v707
        %v709 = vsub.f32 %v408, 1.2499999
        %v710 = vmul.f32 %v709, %v709
        %v711 = vsub.f32 0.0, %v710
        %v712 = vmul.f32 %v711, 1.442695
        %v713 = vpow.pop %v712
        %v714 = vstv %s375
        %v715 = vmul.f32 %v413, %v714
        %v716 = vstv %s376
        %v717 = vmul.f32 %v418, %v716
        %v718 = vstv %s377
        %v719 = vmul.f32 %v423, %v718
        %v720 = vadd.f32 %v715, %v719
        %v721 = vstv %s378
        %v722 = vmul.f32 %v428, %v721
        %v723 = vadd.f32 %v717, %v722
        %v724 = vstv %s379
        %v725 = vmul.f32 %v433, %v724
        %v726 = vadd.f32 %v720, %v725
        %v727 = vstv %s380
        %v728 = vmul.f32 %v438, %v727
        %v729 = vadd.f32 %v723, %v728
        %v730 = vstv %s381
        %v731 = vmul.f32 %v443, %v730
        %v732 = vadd.f32 %v726, %v731
        %v733 = vstv %s382
        %v734 = vmul.f32 %v448, %v733
        %v735 = vadd.f32 %v729, %v734
        %v736 = vstv %s383
        %v737 = vmul.f32 %v453, %v736
        %v738 = vadd.f32 %v732, %v737
        %v739 = vstv %s384
        %v740 = vmul.f32 %v458, %v739
        %v741 = vadd.f32 %v735, %v740
        %v742 = vadd.f32 %v738, %v741
        %v743 = vmul.f32 %v713, %v742
        %v744 = vadd.f32 %v672, %v743
        %v745 = vsub.f32 %v408, 1.7499998
        %v746 = vmul.f32 %v745, %v745
        %v747 = vsub.f32 0.0, %v746
        %v748 = vmul.f32 %v747, 1.442695
        %v749 = vpow.pop %v748
        %v750 = vstv %s385
        %v751 = vmul.f32 %v413, %v750
        %v752 = vstv %s386
        %v753 = vmul.f32 %v418, %v752
        %v754 = vstv %s387
        %v755 = vmul.f32 %v423, %v754
        %v756 = vadd.f32 %v751, %v755
        %v757 = vstv %s388
        %v758 = vmul.f32 %v428, %v757
        %v759 = vadd.f32 %v753, %v758
        %v760 = vstv %s389
        %v761 = vmul.f32 %v433, %v760
        %v762 = vadd.f32 %v756, %v761
        %v763 = vstv %s390
        %v764 = vmul.f32 %v438, %v763
        %v765 = vadd.f32 %v759, %v764
        %v766 = vstv %s391
        %v767 = vmul.f32 %v443, %v766
        %v768 = vadd.f32 %v762, %v767
        %v769 = vstv %s392
        %v770 = vmul.f32 %v448, %v769
        %v771 = vadd.f32 %v765, %v770
        %v772 = vstv %s393
        %v773 = vmul.f32 %v453, %v772
        %v774 = vadd.f32 %v768, %v773
        %v775 = vstv %s394
        %v776 = vmul.f32 %v458, %v775
        %v777 = vadd.f32 %v771, %v776
        %v778 = vadd.f32 %v774, %v777
        %v779 = vmul.f32 %v749, %v778
        %v780 = vadd.f32 %v708, %v779
        %v781 = vsub.f32 %v408, 2.2499998
        %v782 = vmul.f32 %v781, %v781
        %v783 = vsub.f32 0.0, %v782
        %v784 = vmul.f32 %v783, 1.442695
        %v785 = vpow.pop %v784
        %v786 = vstv %s395
        %v787 = vmul.f32 %v413, %v786
        %v788 = vstv %s396
        %v789 = vmul.f32 %v418, %v788
        %v790 = vstv %s397
        %v791 = vmul.f32 %v423, %v790
        %v792 = vadd.f32 %v787, %v791
        %v793 = vstv %s398
        %v794 = vmul.f32 %v428, %v793
        %v795 = vadd.f32 %v789, %v794
        %v796 = vstv %s399
        %v797 = vmul.f32 %v433, %v796
        %v798 = vadd.f32 %v792, %v797
        %v799 = vstv %s400
        %v800 = vmul.f32 %v438, %v799
        %v801 = vadd.f32 %v795, %v800
        %v802 = vstv %s401
        %v803 = vmul.f32 %v443, %v802
        %v804 = vadd.f32 %v798, %v803
        %v805 = vstv %s402
        %v806 = vmul.f32 %v448, %v805
        %v807 = vadd.f32 %v801, %v806
        %v808 = vstv %s403
        %v809 = vmul.f32 %v453, %v808
        %v810 = vadd.f32 %v804, %v809
        %v811 = vstv %s404
        %v812 = vmul.f32 %v458, %v811
        %v813 = vadd.f32 %v807, %v812
        %v814 = vadd.f32 %v810, %v813
        %v815 = vmul.f32 %v785, %v814
        %v816 = vadd.f32 %v744, %v815
        %v817 = vadd.f32 %v780, %v816
        %818 = vst [vmem:[%s303] sm:$0x3] %v817
        %s819 = sand.u32 %s145, 1
        %s820 = scalar_lea.sflag [#allocation4], %s819
        %s821 = sand.u32 %s145, 1
        %s822 = smul.addr %s821, 2
        %s823 = scalar_lea.vmem [#allocation9], %s822
        // Predicated region
        $region45: #{tpu_custom_call.1} parent=31 // pred_check
          %p824 = pneg %p155
        $region46: #{tpu_custom_call.1} parent=31 // pred_check_branch
          %826 = sbr.rel (%p824) target = $region48
        $region47: #{tpu_custom_call.1} parent=31 // pred_region
          %828 = vsyncadd %s820, 0
          %s829 = sadd.s32 %s33, %s32
          %s830 = smul.addr %s31, 2
          %s831 = sadd.s32 %s829, %s830
          %s832 = smul.addr %s831, 2
          %s833 = scalar_lea.hbm %s3, %s832
          %s835 = sshll.u32 %s823, 4
          %s836 = int_to_ptr.vmem [resolvable:$true] %s835
          %s837 = sshll.u32 %s833, 4
          %s838 = int_to_ptr.hbm [resolvable:$true] %s837
          %840 = dma.vmem_to_hbm [thread:$0]  %s836, 32, %s838, %s820
        $region48: #{tpu_custom_call.1} parent=31 // pred_fallthru
          _
      $region32: #{tpu_custom_call.1} parent=5 // pred_fallthru
        _
      %p841 = scmp.le.s32.totalorder 2, %s21
      // Predicated region
      $region49: #{tpu_custom_call.1} parent=5 // pred_check
        %p842 = pneg %p841
      $region50: #{tpu_custom_call.1} parent=5 // pred_check_branch
        %844 = sbr.rel (%p842) target = $region52
      $region51: #{tpu_custom_call.1} parent=5 // pred_region
        %s845 = ssub.s32 %s21, 2
        // Predicated region
        $region53: #{tpu_custom_call.1} parent=51 // pred_check
          %p846 = pneg %p161
        $region54: #{tpu_custom_call.1} parent=51 // pred_check_branch
          %848 = sbr.rel (%p846) target = $region56
        $region55: #{tpu_custom_call.1} parent=51 // pred_region
          %s849 = sand.u32 %s146, 1
          %s850 = scalar_lea.sflag [#allocation4], %s849
          %s851 = sand.u32 %s146, 1
          %s852 = smul.addr %s851, 2
          %s853 = scalar_lea.vmem [#allocation9], %s852
          %855 = dma.done %s850, 32
        $region56: #{tpu_custom_call.1} parent=51 // pred_fallthru
          _
      $region52: #{tpu_custom_call.1} parent=5 // pred_fallthru
        _
    $region6: #{tpu_custom_call.1} parent=1 // loop_footer
      %s25 = sadd.s32 1, %s21
    $region7: #{tpu_custom_call.1} parent=1 // loop_footer_branch
      %20 = sbr.rel target = $region3
    $region8: #{tpu_custom_call.1} parent=1 // loop_exit
      _
    %856 = vsyncpa [#allocation3], 1
    %s857 = scalar_lea.sflag [#allocation3], 1
    %858 = vsyncpa %s857, 1
    %859 = vsyncpa [#allocation8], 1
    %s860 = scalar_lea.sflag [#allocation8], 1
    %861 = vsyncpa %s860, 1
    %862 = vsyncpa [#allocation4], 1
    %s863 = scalar_lea.sflag [#allocation4], 1
    %864 = vsyncpa %s863, 1
    %865 = vsyncpa [#allocation5], 1
    %s866 = scalar_lea.sflag [#allocation5], 1
    %867 = vsyncpa %s866, 1

</llo_original>
